<compile_context>
chip_gen: v5e
topology: v5e:2x2
jax: 0.10.0
libtpu: 0.0.40
codegen_flags: <defaults>
</compile_context>

<pallas_src>
import jax
import jax.numpy as jnp
from jax.experimental import pallas as pl
from jax.experimental.pallas import tpu as pltpu


def _netd_sc_kernel(x_ref, w1_ref, b1_ref, w23_ref, b23_ref, w4_ref, b4_ref,
                    gan_ref, cl_ref, acc_ref):
    k = pl.program_id(0)

    @pl.when(k == 0)
    def _init():
        acc_ref[...] = jnp.zeros_like(acc_ref)

    # h chunk for this slice of h_dim: [B, TN]  (bf16 MXU, f32 accumulate)
    h = jnp.dot(x_ref[...], w1_ref[...], preferred_element_type=jnp.float32)
    h = jnp.maximum(h + b1_ref[...], 0.0)

    # Accumulate h_chunk @ [W3 | W2(pad)]_chunk into [B, 512+128] f32 scratch.
    acc_ref[...] += jnp.dot(h.astype(jnp.bfloat16), w23_ref[...],
                            preferred_element_type=jnp.float32)

    @pl.when(k == pl.num_programs(0) - 1)
    def _finalize():
        full = acc_ref[...] + b23_ref[...]          # [B, 512+128]
        gan_w = gan_ref.shape[1]                    # 128 (padded gan slab)
        mid = acc_ref.shape[1] - gan_w              # 512

        # gan head: column `mid` holds the real logit, padding columns are 0.
        gan_ref[...] = full[:, mid:]

        # classifier head: LeakyReLU(0.2) -> Linear(512, y_dim_pad) -> ReLU
        c = full[:, :mid]
        c = jnp.where(c >= 0.0, c, 0.2 * c)
        cl = jnp.dot(c.astype(jnp.bfloat16), w4_ref[...],
                     preferred_element_type=jnp.float32) + b4_ref[...]
        cl_ref[...] = jnp.maximum(cl, 0.0)


def netd_sc_forward(x, params, *, tn=256):
    """x: [B, X_dim] float32.  params: dict of f32 weights/biases (weights [in, out])."""
    B = x.shape[0]
    X_dim, h_dim = params["w1"].shape
    mid = params["w3"].shape[1]          # 512
    y_dim = params["w4"].shape[1]        # 50
    assert h_dim % tn == 0

    GAN_PAD = 128                        # lane-dense slab width for the gan head
    Y_PAD = 128                          # y_dim padded to a full lane width
    NW = mid + GAN_PAD                   # packed second-layer width (640)

    # --- pack weights: fold W2 into W3 (column `mid` of a lane-dense slab) ---
    w23 = jnp.zeros((h_dim, NW), jnp.float32)
    w23 = w23.at[:, :mid].set(params["w3"])
    w23 = w23.at[:, mid:mid + 1].set(params["w2"])
    b23 = jnp.zeros((1, NW), jnp.float32)
    b23 = b23.at[:, :mid].set(params["b3"])
    b23 = b23.at[:, mid:mid + 1].set(params["b2"])
    w4p = jnp.zeros((mid, Y_PAD), jnp.float32).at[:, :y_dim].set(params["w4"])
    b4p = jnp.zeros((1, Y_PAD), jnp.float32).at[:, :y_dim].set(params["b4"])

    # bf16 weights/activations on the HBM-bound path; biases stay f32.
    x_bf = x.astype(jnp.bfloat16)
    w1_bf = params["w1"].astype(jnp.bfloat16)
    w23_bf = w23.astype(jnp.bfloat16)
    w4_bf = w4p.astype(jnp.bfloat16)
    b1 = params["b1"]

    flops = 2 * B * (X_dim * h_dim + h_dim * NW + mid * Y_PAD)
    bytes_accessed = (2 * (x_bf.size + w1_bf.size + w23_bf.size + w4_bf.size)
                      + 4 * (b1.size + b23.size + b4p.size)
                      + 4 * B * (GAN_PAD + Y_PAD))
    cost = pl.CostEstimate(flops=flops, transcendentals=0,
                           bytes_accessed=bytes_accessed)

    grid_spec = pltpu.PrefetchScalarGridSpec(
        num_scalar_prefetch=0,
        grid=(h_dim // tn,),
        in_specs=[
            pl.BlockSpec((B, X_dim), lambda k: (0, 0)),       # x (resident)
            pl.BlockSpec((X_dim, tn), lambda k: (0, k)),      # W1 column slice
            pl.BlockSpec((1, tn), lambda k: (0, k)),          # b1 slice
            pl.BlockSpec((tn, NW), lambda k: (k, 0)),         # [W3|W2] row slice
            pl.BlockSpec((1, NW), lambda k: (0, 0)),          # b23 (resident)
            pl.BlockSpec((mid, Y_PAD), lambda k: (0, 0)),     # W4 (resident)
            pl.BlockSpec((1, Y_PAD), lambda k: (0, 0)),       # b4 (resident)
        ],
        out_specs=[
            pl.BlockSpec((B, GAN_PAD), lambda k: (0, 0)),
            pl.BlockSpec((B, Y_PAD), lambda k: (0, 0)),
        ],
        scratch_shapes=[pltpu.VMEM((B, NW), jnp.float32)],
    )

    gan_p, cl_p = pl.pallas_call(
        _netd_sc_kernel,
        out_shape=(jax.ShapeDtypeStruct((B, GAN_PAD), jnp.float32),
                   jax.ShapeDtypeStruct((B, Y_PAD), jnp.float32)),
        grid_spec=grid_spec,
        compiler_params=pltpu.CompilerParams(
            dimension_semantics=("arbitrary",),
            vmem_limit_bytes=32 << 20),
        cost_estimate=cost,
    )(x_bf, w1_bf, b1, w23_bf, b23, w4_bf, b4p)

    return gan_p[:, :1], cl_p[:, :y_dim]


def init_params(key, X_dim=2048, h_dim=1024, mid_dim=512, y_dim=50):
    """Deterministic synthetic init (not a checkpoint load). Weights are [in, out]."""
    ks = jax.random.split(key, 8)

    def lin(kw, kb, fan_in, fan_out):
        bound = 1.0 / jnp.sqrt(fan_in)
        w = jax.random.uniform(kw, (fan_in, fan_out), jnp.float32, -bound, bound)
        b = jax.random.uniform(kb, (1, fan_out), jnp.float32, -bound, bound)
        return w, b

    w1, b1 = lin(ks[0], ks[1], X_dim, h_dim)
    w2, b2 = lin(ks[2], ks[3], h_dim, 1)
    w3, b3 = lin(ks[4], ks[5], h_dim, mid_dim)
    w4, b4 = lin(ks[6], ks[7], mid_dim, y_dim)
    return {"w1": w1, "b1": b1, "w2": w2, "b2": b2,
            "w3": w3, "b3": b3, "w4": w4, "b4": b4}


def reference_forward(x, p):
    h = jnp.maximum(x @ p["w1"] + p["b1"], 0.0)
    gan = h @ p["w2"] + p["b2"]
    c = h @ p["w3"] + p["b3"]
    c = jnp.where(c >= 0.0, c, 0.2 * c)
    cl = jnp.maximum(c @ p["w4"] + p["b4"], 0.0)
    return gan, cl


if __name__ == "__main__":
    key = jax.random.PRNGKey(0)
    k_x, k_p = jax.random.split(key)

    # Dims implied by the module: X_dim=2048, h_dim=1024, 512, y_dim=50; small batch.
    B, X_dim, h_dim, mid_dim, y_dim = 8, 2048, 1024, 512, 50
    x = jax.random.normal(k_x, (B, X_dim), jnp.float32)
    params = init_params(k_p, X_dim=X_dim, h_dim=h_dim, mid_dim=mid_dim, y_dim=y_dim)

    gan, cl = netd_sc_forward(x, params)
    jax.block_until_ready((gan, cl))

    gan_ref, cl_ref = reference_forward(x, params)
    assert gan.shape == (B, 1) and cl.shape == (B, y_dim)
    # bf16 weight path: loosened tolerances vs the f32 reference.
    assert jnp.allclose(gan, gan_ref, atol=5e-2, rtol=5e-2), \
        float(jnp.max(jnp.abs(gan - gan_ref)))
    assert jnp.allclose(cl, cl_ref, atol=5e-2, rtol=5e-2), \
        float(jnp.max(jnp.abs(cl - cl_ref)))

    print("KERNEL_OK")
</pallas_src>

<mosaic_0001>
module attributes {stable_mosaic.version = 11 : i64} {
  func.func @_netd_sc_kernel(%arg0: i32, %arg1: memref<8x2048xbf16, #tpu.memory_space<vmem>>, %arg2: memref<2048x256xbf16, #tpu.memory_space<vmem>>, %arg3: memref<1x256xf32, #tpu.memory_space<vmem>>, %arg4: memref<256x640xbf16, #tpu.memory_space<vmem>>, %arg5: memref<1x640xf32, #tpu.memory_space<vmem>>, %arg6: memref<512x128xbf16, #tpu.memory_space<vmem>>, %arg7: memref<1x128xf32, #tpu.memory_space<vmem>>, %arg8: memref<8x128xf32, #tpu.memory_space<vmem>>, %arg9: memref<8x128xf32, #tpu.memory_space<vmem>>, %arg10: memref<8x640xf32, #tpu.memory_space<vmem>>) attributes {dimension_semantics = [#tpu.dimension_semantics<arbitrary>], iteration_bounds = array<i64: 4>, scalar_prefetch = 0 : i64, scratch_operands = 1 : i64, tpu.core_type = #tpu.core_type<tc>, window_params = [{pipeline_mode = #tpu.pipeline_mode<synchronous>, transform_indices = @transform_0, window_bounds = array<i64: 8, 2048>}, {transform_indices = @transform_1, window_bounds = array<i64: 2048, 256>}, {transform_indices = @transform_2, window_bounds = array<i64: 1, 256>}, {transform_indices = @transform_3, window_bounds = array<i64: 256, 640>}, {pipeline_mode = #tpu.pipeline_mode<synchronous>, transform_indices = @transform_4, window_bounds = array<i64: 1, 640>}, {pipeline_mode = #tpu.pipeline_mode<synchronous>, transform_indices = @transform_5, window_bounds = array<i64: 512, 128>}, {pipeline_mode = #tpu.pipeline_mode<synchronous>, transform_indices = @transform_6, window_bounds = array<i64: 1, 128>}, {pipeline_mode = #tpu.pipeline_mode<synchronous>, transform_indices = @transform_7, window_bounds = array<i64: 8, 128>}, {pipeline_mode = #tpu.pipeline_mode<synchronous>, transform_indices = @transform_8, window_bounds = array<i64: 8, 128>}]} {
    %c0_i32 = arith.constant 0 : i32
    %0 = arith.cmpi eq, %arg0, %c0_i32 : i32
    %1 = arith.extui %0 : i1 to i32
    %c0_i32_0 = arith.constant 0 : i32
    %2 = arith.cmpi ne, %1, %c0_i32_0 : i32
    scf.if %2 {
      %cst_15 = arith.constant 0.000000e+00 : f32
      %20 = vector.broadcast %cst_15 : f32 to vector<8x640xf32>
      %c0_16 = arith.constant 0 : index
      %c0_17 = arith.constant 0 : index
      %21 = vector.load %arg10[%c0_16, %c0_17] : memref<8x640xf32, #tpu.memory_space<vmem>>, vector<8x640xf32>
      tpu.vector_store %arg10[%c0_16, %c0_17], %20 {strides = array<i32>} : memref<8x640xf32, #tpu.memory_space<vmem>>, vector<8x640xf32>,
    } else {
    }
    %c0 = arith.constant 0 : index
    %c0_1 = arith.constant 0 : index
    %3 = vector.load %arg1[%c0, %c0_1] : memref<8x2048xbf16, #tpu.memory_space<vmem>>, vector<8x2048xbf16>
    %c0_2 = arith.constant 0 : index
    %c0_3 = arith.constant 0 : index
    %4 = vector.load %arg2[%c0_2, %c0_3] : memref<2048x256xbf16, #tpu.memory_space<vmem>>, vector<2048x256xbf16>
    %cst = arith.constant dense<0.000000e+00> : vector<8x256xf32>
    %5 = tpu.matmul %3, %4, %cst {dimension_numbers = #tpu.dot_dimension_numbers<[1], [0], [0], [1], [0, 0, 1, 1], [], []>} : vector<8x2048xbf16>, vector<2048x256xbf16>, vector<8x256xf32> -> vector<8x256xf32>
    %c0_4 = arith.constant 0 : index
    %c0_5 = arith.constant 0 : index
    %6 = vector.load %arg3[%c0_4, %c0_5] : memref<1x256xf32, #tpu.memory_space<vmem>>, vector<1x256xf32>
    %7 = vector.broadcast %6 : vector<1x256xf32> to vector<8x256xf32>
    %8 = arith.addf %5, %7 : vector<8x256xf32>
    %cst_6 = arith.constant 0.000000e+00 : f32
    %9 = vector.broadcast %cst_6 : f32 to vector<8x256xf32>
    %10 = arith.maximumf %8, %9 : vector<8x256xf32>
    %c0_7 = arith.constant 0 : index
    %c0_8 = arith.constant 0 : index
    %11 = vector.load %arg10[%c0_7, %c0_8] : memref<8x640xf32, #tpu.memory_space<vmem>>, vector<8x640xf32>
    %12 = arith.truncf %10 : vector<8x256xf32> to vector<8x256xbf16>
    %c0_9 = arith.constant 0 : index
    %c0_10 = arith.constant 0 : index
    %13 = vector.load %arg4[%c0_9, %c0_10] : memref<256x640xbf16, #tpu.memory_space<vmem>>, vector<256x640xbf16>
    %cst_11 = arith.constant dense<0.000000e+00> : vector<8x640xf32>
    %14 = tpu.matmul %12, %13, %cst_11 {dimension_numbers = #tpu.dot_dimension_numbers<[1], [0], [0], [1], [0, 0, 1, 1], [], []>} : vector<8x256xbf16>, vector<256x640xbf16>, vector<8x640xf32> -> vector<8x640xf32>
    %15 = arith.addf %11, %14 : vector<8x640xf32>
    %c0_12 = arith.constant 0 : index
    %c0_13 = arith.constant 0 : index
    %16 = vector.load %arg10[%c0_12, %c0_13] : memref<8x640xf32, #tpu.memory_space<vmem>>, vector<8x640xf32>
    tpu.vector_store %arg10[%c0_12, %c0_13], %15 {strides = array<i32>} : memref<8x640xf32, #tpu.memory_space<vmem>>, vector<8x640xf32>,
    %c3_i32 = arith.constant 3 : i32
    %17 = arith.cmpi eq, %arg0, %c3_i32 : i32
    %18 = arith.extui %17 : i1 to i32
    %c0_i32_14 = arith.constant 0 : i32
    %19 = arith.cmpi ne, %18, %c0_i32_14 : i32
    scf.if %19 {
      %c0_15 = arith.constant 0 : index
      %c0_16 = arith.constant 0 : index
      %20 = vector.load %arg10[%c0_15, %c0_16] : memref<8x640xf32, #tpu.memory_space<vmem>>, vector<8x640xf32>
      %c0_17 = arith.constant 0 : index
      %c0_18 = arith.constant 0 : index
      %21 = vector.load %arg5[%c0_17, %c0_18] : memref<1x640xf32, #tpu.memory_space<vmem>>, vector<1x640xf32>
      %22 = vector.broadcast %21 : vector<1x640xf32> to vector<8x640xf32>
      %23 = arith.addf %20, %22 : vector<8x640xf32>
      %24 = vector.extract_strided_slice %23 {offsets = [0, 512], sizes = [8, 128], strides = [1, 1]} : vector<8x640xf32> to vector<8x128xf32>
      %c0_19 = arith.constant 0 : index
      %c0_20 = arith.constant 0 : index
      %25 = vector.load %arg8[%c0_19, %c0_20] : memref<8x128xf32, #tpu.memory_space<vmem>>, vector<8x128xf32>
      tpu.vector_store %arg8[%c0_19, %c0_20], %24 {strides = array<i32>} : memref<8x128xf32, #tpu.memory_space<vmem>>, vector<8x128xf32>,
      %26 = vector.extract_strided_slice %23 {offsets = [0, 0], sizes = [8, 512], strides = [1, 1]} : vector<8x640xf32> to vector<8x512xf32>
      %cst_21 = arith.constant 0.000000e+00 : f32
      %27 = vector.broadcast %cst_21 : f32 to vector<8x512xf32>
      %28 = arith.cmpf oge, %26, %27 : vector<8x512xf32>
      %cst_22 = arith.constant 2.000000e-01 : f32
      %29 = vector.broadcast %cst_22 : f32 to vector<8x512xf32>
      %30 = arith.mulf %29, %26 : vector<8x512xf32>
      %31 = arith.select %28, %26, %30 : vector<8x512xi1>, vector<8x512xf32>
      %32 = arith.truncf %31 : vector<8x512xf32> to vector<8x512xbf16>
      %c0_23 = arith.constant 0 : index
      %c0_24 = arith.constant 0 : index
      %33 = vector.load %arg6[%c0_23, %c0_24] : memref<512x128xbf16, #tpu.memory_space<vmem>>, vector<512x128xbf16>
      %cst_25 = arith.constant dense<0.000000e+00> : vector<8x128xf32>
      %34 = tpu.matmul %32, %33, %cst_25 {dimension_numbers = #tpu.dot_dimension_numbers<[1], [0], [0], [1], [0, 0, 1, 1], [], []>} : vector<8x512xbf16>, vector<512x128xbf16>, vector<8x128xf32> -> vector<8x128xf32>
      %c0_26 = arith.constant 0 : index
      %c0_27 = arith.constant 0 : index
      %35 = vector.load %arg7[%c0_26, %c0_27] : memref<1x128xf32, #tpu.memory_space<vmem>>, vector<1x128xf32>
      %36 = vector.broadcast %35 : vector<1x128xf32> to vector<8x128xf32>
      %37 = arith.addf %34, %36 : vector<8x128xf32>
      %cst_28 = arith.constant 0.000000e+00 : f32
      %38 = vector.broadcast %cst_28 : f32 to vector<8x128xf32>
      %39 = arith.maximumf %37, %38 : vector<8x128xf32>
      %c0_29 = arith.constant 0 : index
      %c0_30 = arith.constant 0 : index
      %40 = vector.load %arg9[%c0_29, %c0_30] : memref<8x128xf32, #tpu.memory_space<vmem>>, vector<8x128xf32>
      tpu.vector_store %arg9[%c0_29, %c0_30], %39 {strides = array<i32>} : memref<8x128xf32, #tpu.memory_space<vmem>>, vector<8x128xf32>,
    } else {
    }
    return
  }
  func.func @transform_0(%arg0: i32) -> (i32, i32) {
    %c0_i32 = arith.constant 0 : i32
    %c0_i32_0 = arith.constant 0 : i32
    %c0_i32_1 = arith.constant 0 : i32
    return %c0_i32, %c0_i32_0 : i32, i32
  }
  func.func @transform_1(%arg0: i32) -> (i32, i32) {
    %c0_i32 = arith.constant 0 : i32
    %c0_i32_0 = arith.constant 0 : i32
    return %c0_i32, %arg0 : i32, i32
  }
  func.func @transform_2(%arg0: i32) -> (i32, i32) {
    %c0_i32 = arith.constant 0 : i32
    %c0_i32_0 = arith.constant 0 : i32
    return %c0_i32, %arg0 : i32, i32
  }
  func.func @transform_3(%arg0: i32) -> (i32, i32) {
    %c0_i32 = arith.constant 0 : i32
    %c0_i32_0 = arith.constant 0 : i32
    return %arg0, %c0_i32 : i32, i32
  }
  func.func @transform_4(%arg0: i32) -> (i32, i32) {
    %c0_i32 = arith.constant 0 : i32
    %c0_i32_0 = arith.constant 0 : i32
    %c0_i32_1 = arith.constant 0 : i32
    return %c0_i32, %c0_i32_0 : i32, i32
  }
  func.func @transform_5(%arg0: i32) -> (i32, i32) {
    %c0_i32 = arith.constant 0 : i32
    %c0_i32_0 = arith.constant 0 : i32
    %c0_i32_1 = arith.constant 0 : i32
    return %c0_i32, %c0_i32_0 : i32, i32
  }
  func.func @transform_6(%arg0: i32) -> (i32, i32) {
    %c0_i32 = arith.constant 0 : i32
    %c0_i32_0 = arith.constant 0 : i32
    %c0_i32_1 = arith.constant 0 : i32
    return %c0_i32, %c0_i32_0 : i32, i32
  }
  func.func @transform_7(%arg0: i32) -> (i32, i32) {
    %c0_i32 = arith.constant 0 : i32
    %c0_i32_0 = arith.constant 0 : i32
    %c0_i32_1 = arith.constant 0 : i32
    return %c0_i32, %c0_i32_0 : i32, i32
  }
  func.func @transform_8(%arg0: i32) -> (i32, i32) {
    %c0_i32 = arith.constant 0 : i32
    %c0_i32_0 = arith.constant 0 : i32
    %c0_i32_1 = arith.constant 0 : i32
    return %c0_i32, %c0_i32_0 : i32, i32
  }
}

</mosaic_0001>

<llo_original>
// kernel: tpu_custom_call.1
$region0: #{tpu_custom_call.1}
  #allocation0 [shape = 'u32[]', space=smem, size = 0x4, offset = 0x4, fixed_abs, tag = 'smem constant byte address 0x4 - core index']
  #allocation1 [shape = 'u32[72,128]{1,0:T(1,128)}', space=vmem, size = 0x9000, scoped, tag = 'internal scratch']
  #allocation2 [shape = 'f32[8,640]{1,0:T(8,128)}', space=vmem, size = 0x5000, scoped, tag = 'scratch operand']
  %s0 = inlined_call_operand.hbm [shape: bf16[8,2048], index: 0, kind: input, shape index: {}]
  %s1 = inlined_call_operand.hbm [shape: bf16[2048,1024], index: 1, kind: input, shape index: {}]
  %s2 = inlined_call_operand.hbm [shape: f32[1,1024], index: 2, kind: input, shape index: {}]
  %s3 = inlined_call_operand.hbm [shape: bf16[1024,640], index: 3, kind: input, shape index: {}]
  %s4 = inlined_call_operand.hbm [shape: f32[1,640], index: 4, kind: input, shape index: {}]
  %s5 = inlined_call_operand.hbm [shape: bf16[512,128], index: 5, kind: input, shape index: {}]
  %s6 = inlined_call_operand.hbm [shape: f32[1,128], index: 6, kind: input, shape index: {}]
  %s7 = inlined_call_operand.hbm [shape: f32[8,128], index: 7, kind: output, shape index: {0}]
  %s8 = inlined_call_operand.hbm [shape: f32[8,128], index: 8, kind: output, shape index: {1}]
  %9 = xla_tuple %s7, %s8
  %s10 = sld [smem:[#allocation0]]
  $region105: #{tpu_custom_call.1} parent=0
    _
  %s12 = ssub.s32 1, %s10
  %s13 = scalar_select 0, %s12, %s10
  $region1: #{tpu_custom_call.1} parent=0
    #allocation3 [shape = 'u8[32768]{0}', space=vmem, size = 0x8000, scoped, tag = 'input window, operand 0, single buffered']
    #allocation4 [shape = 's32[2]{0}', space=sflag, size = 0x8, scoped, tag = 'scoped memory for tpu_custom_call.1']
    #allocation5 [shape = 's32[2]{0}', space=sflag, size = 0x8, scoped, tag = 'scoped memory for tpu_custom_call.1']
    #allocation6 [shape = 'u8[2097152]{0}', space=vmem, size = 0x200000, scoped, tag = 'input window, operand 1']
    #allocation7 [shape = 's32[2]{0}', space=sflag, size = 0x8, scoped, tag = 'scoped memory for tpu_custom_call.1']
    #allocation8 [shape = 'u8[2048]{0}', space=vmem, size = 0x800, scoped, tag = 'input window, operand 2']
    #allocation9 [shape = 'u8[655360]{0}', space=vmem, size = 0xa0000, scoped, tag = 'input window, operand 3']
    #allocation10 [shape = 's32[2]{0}', space=sflag, size = 0x8, scoped, tag = 'scoped memory for tpu_custom_call.1']
    #allocation11 [shape = 'u8[2560]{0}', space=vmem, size = 0xc00, scoped, tag = 'input window, operand 4, single buffered']
    #allocation12 [shape = 'u8[131072]{0}', space=vmem, size = 0x20000, scoped, tag = 'input window, operand 5, single buffered']
    #allocation13 [shape = 's32[1]{0}', space=sflag, size = 0x4, scoped, tag = 'scoped memory for tpu_custom_call.1']
    #allocation14 [shape = 'u8[512]{0}', space=vmem, size = 0x400, scoped, tag = 'input window, operand 6, single buffered']
    #allocation15 [shape = 'u8[4096]{0}', space=vmem, size = 0x1000, scoped, tag = 'output window, operand 0, single buffered']
    #allocation16 [shape = 'u8[4096]{0}', space=vmem, size = 0x1000, scoped, tag = 'output window, operand 1, single buffered']
    #allocation17 [shape = 's32[1]{0}', space=sflag, size = 0x4, scoped, tag = 'scoped memory for tpu_custom_call.1']
    %14 = vsyncpa [#allocation4], 0
    %15 = vsyncpa [#allocation7], 0
    %s16 = scalar_lea.sflag [#allocation7], 1
    %17 = vsyncpa %s16, 0
    %18 = vsyncpa [#allocation10], 0
    %s19 = scalar_lea.sflag [#allocation10], 1
    %20 = vsyncpa %s19, 0
    %21 = vsyncpa [#allocation13], 0
    %22 = vsyncpa [#allocation5], 0
    %23 = vsyncpa [#allocation17], 0
    loop: start=0, step=1, limit=6
    $region2: #{tpu_custom_call.1} parent=1 // loop_pre_header
      _
    $region3: #{tpu_custom_call.1} parent=1 // loop_header
      %s25 = sphi 0, %s29
      %p26 = scmp.ge.s32.totalorder %s25, 6
      %s33 = sphi 0, %s33
      %s35 = sphi 0, %s33
      %s36 = sphi 0, %s35
      %s50 = sphi 0, %s36
      %s56 = sphi 0, %s58
      %s59 = sphi 0, %s56
      %s60 = sphi 0, %s59
      %s76 = sphi 0, %s60
      %s82 = sphi 0, %s84
      %s85 = sphi 0, %s82
      %s86 = sphi 0, %s85
      %s102 = sphi 0, %s86
      %s108 = sphi 0, %s110
      %s111 = sphi 0, %s108
      %s112 = sphi 0, %s111
      %s128 = sphi 0, %s112
      %s132 = sphi 0, %s132
      %s134 = sphi 0, %s132
      %s135 = sphi 0, %s134
      %s149 = sphi 0, %s135
      %s153 = sphi 0, %s153
      %s155 = sphi 0, %s153
      %s156 = sphi 0, %s155
      %s170 = sphi 0, %s156
      %s174 = sphi 0, %s174
      %s176 = sphi 0, %s174
      %s177 = sphi 0, %s176
      %s191 = sphi 0, %s177
      %s195 = sphi 0, %s195
      %s197 = sphi 0, %s195
      %s198 = sphi 0, %s197
      %s212 = sphi 0, %s198
      %s216 = sphi 0, %s216
      %s218 = sphi 0, %s216
      %s219 = sphi 0, %s218
      %s233 = sphi 0, %s219
    $region4: #{tpu_custom_call.1} parent=1 // loop_header_branch
      %28 = sbr.rel (%p26) target = $region8
    $region5: #{tpu_custom_call.1} parent=1 // loop_body
      %s30 = ssub.s32 %s25, 1
      %s31 = ssub.s32 %s25, 2
      %s32 = sadd.s32 %s25, 1
      %s34 = sadd.s32 %s33, 1
      %p37 = scmp.eq.s32.totalorder %s25, 3
      %p38 = scmp.ne.s32.totalorder %s33, %s35
      %p39 = scmp.eq.s32.totalorder %s25, 0
      %p40 = por %p38, %p39
      %p41 = scmp.ne.s32.totalorder %s33, %s35
      %p42 = scmp.eq.s32.totalorder %s30, 3
      %p43 = por %p41, %p42
      %p44 = scmp.ne.s32.totalorder %s35, %s36
      %p45 = scmp.eq.s32.totalorder %s30, 0
      %p46 = por %p44, %p45
      %p47 = scmp.ne.s32.totalorder %s35, %s36
      %p48 = scmp.eq.s32.totalorder %s31, 3
      %p49 = por %p47, %p48
      %p51 = scmp.ne.s32.totalorder %s36, %s50
      %p52 = scmp.eq.s32.totalorder %s31, 0
      %p53 = por %p51, %p52
      %s54 = ssub.s32 %s25, %s32
      %p55 = scmp.eq.s32.totalorder %s54, 0
      %s57 = sadd.s32 %s56, 1
      %s58 = scalar_select %p55, %s56, %s57
      %p61 = pneg %p55
      %p62 = scmp.eq.s32.totalorder %s25, 3
      %p63 = por %p61, %p62
      %p64 = scmp.ne.s32.totalorder %s56, %s59
      %p65 = scmp.eq.s32.totalorder %s25, 0
      %p66 = por %p64, %p65
      %p67 = scmp.ne.s32.totalorder %s56, %s59
      %p68 = scmp.eq.s32.totalorder %s30, 3
      %p69 = por %p67, %p68
      %p70 = scmp.ne.s32.totalorder %s59, %s60
      %p71 = scmp.eq.s32.totalorder %s30, 0
      %p72 = por %p70, %p71
      %p73 = scmp.ne.s32.totalorder %s59, %s60
      %p74 = scmp.eq.s32.totalorder %s31, 3
      %p75 = por %p73, %p74
      %p77 = scmp.ne.s32.totalorder %s60, %s76
      %p78 = scmp.eq.s32.totalorder %s31, 0
      %p79 = por %p77, %p78
      %s80 = ssub.s32 %s25, %s32
      %p81 = scmp.eq.s32.totalorder %s80, 0
      %s83 = sadd.s32 %s82, 1
      %s84 = scalar_select %p81, %s82, %s83
      %p87 = pneg %p81
      %p88 = scmp.eq.s32.totalorder %s25, 3
      %p89 = por %p87, %p88
      %p90 = scmp.ne.s32.totalorder %s82, %s85
      %p91 = scmp.eq.s32.totalorder %s25, 0
      %p92 = por %p90, %p91
      %p93 = scmp.ne.s32.totalorder %s82, %s85
      %p94 = scmp.eq.s32.totalorder %s30, 3
      %p95 = por %p93, %p94
      %p96 = scmp.ne.s32.totalorder %s85, %s86
      %p97 = scmp.eq.s32.totalorder %s30, 0
      %p98 = por %p96, %p97
      %p99 = scmp.ne.s32.totalorder %s85, %s86
      %p100 = scmp.eq.s32.totalorder %s31, 3
      %p101 = por %p99, %p100
      %p103 = scmp.ne.s32.totalorder %s86, %s102
      %p104 = scmp.eq.s32.totalorder %s31, 0
      %p105 = por %p103, %p104
      %s106 = ssub.s32 %s25, %s32
      %p107 = scmp.eq.s32.totalorder %s106, 0
      %s109 = sadd.s32 %s108, 1
      %s110 = scalar_select %p107, %s108, %s109
      %p113 = pneg %p107
      %p114 = scmp.eq.s32.totalorder %s25, 3
      %p115 = por %p113, %p114
      %p116 = scmp.ne.s32.totalorder %s108, %s111
      %p117 = scmp.eq.s32.totalorder %s25, 0
      %p118 = por %p116, %p117
      %p119 = scmp.ne.s32.totalorder %s108, %s111
      %p120 = scmp.eq.s32.totalorder %s30, 3
      %p121 = por %p119, %p120
      %p122 = scmp.ne.s32.totalorder %s111, %s112
      %p123 = scmp.eq.s32.totalorder %s30, 0
      %p124 = por %p122, %p123
      %p125 = scmp.ne.s32.totalorder %s111, %s112
      %p126 = scmp.eq.s32.totalorder %s31, 3
      %p127 = por %p125, %p126
      %p129 = scmp.ne.s32.totalorder %s112, %s128
      %p130 = scmp.eq.s32.totalorder %s31, 0
      %p131 = por %p129, %p130
      %s133 = sadd.s32 %s132, 1
      %p136 = scmp.eq.s32.totalorder %s25, 3
      %p137 = scmp.ne.s32.totalorder %s132, %s134
      %p138 = scmp.eq.s32.totalorder %s25, 0
      %p139 = por %p137, %p138
      %p140 = scmp.ne.s32.totalorder %s132, %s134
      %p141 = scmp.eq.s32.totalorder %s30, 3
      %p142 = por %p140, %p141
      %p143 = scmp.ne.s32.totalorder %s134, %s135
      %p144 = scmp.eq.s32.totalorder %s30, 0
      %p145 = por %p143, %p144
      %p146 = scmp.ne.s32.totalorder %s134, %s135
      %p147 = scmp.eq.s32.totalorder %s31, 3
      %p148 = por %p146, %p147
      %p150 = scmp.ne.s32.totalorder %s135, %s149
      %p151 = scmp.eq.s32.totalorder %s31, 0
      %p152 = por %p150, %p151
      %s154 = sadd.s32 %s153, 1
      %p157 = scmp.eq.s32.totalorder %s25, 3
      %p158 = scmp.ne.s32.totalorder %s153, %s155
      %p159 = scmp.eq.s32.totalorder %s25, 0
      %p160 = por %p158, %p159
      %p161 = scmp.ne.s32.totalorder %s153, %s155
      %p162 = scmp.eq.s32.totalorder %s30, 3
      %p163 = por %p161, %p162
      %p164 = scmp.ne.s32.totalorder %s155, %s156
      %p165 = scmp.eq.s32.totalorder %s30, 0
      %p166 = por %p164, %p165
      %p167 = scmp.ne.s32.totalorder %s155, %s156
      %p168 = scmp.eq.s32.totalorder %s31, 3
      %p169 = por %p167, %p168
      %p171 = scmp.ne.s32.totalorder %s156, %s170
      %p172 = scmp.eq.s32.totalorder %s31, 0
      %p173 = por %p171, %p172
      %s175 = sadd.s32 %s174, 1
      %p178 = scmp.eq.s32.totalorder %s25, 3
      %p179 = scmp.ne.s32.totalorder %s174, %s176
      %p180 = scmp.eq.s32.totalorder %s25, 0
      %p181 = por %p179, %p180
      %p182 = scmp.ne.s32.totalorder %s174, %s176
      %p183 = scmp.eq.s32.totalorder %s30, 3
      %p184 = por %p182, %p183
      %p185 = scmp.ne.s32.totalorder %s176, %s177
      %p186 = scmp.eq.s32.totalorder %s30, 0
      %p187 = por %p185, %p186
      %p188 = scmp.ne.s32.totalorder %s176, %s177
      %p189 = scmp.eq.s32.totalorder %s31, 3
      %p190 = por %p188, %p189
      %p192 = scmp.ne.s32.totalorder %s177, %s191
      %p193 = scmp.eq.s32.totalorder %s31, 0
      %p194 = por %p192, %p193
      %s196 = sadd.s32 %s195, 1
      %p199 = scmp.eq.s32.totalorder %s25, 3
      %p200 = scmp.ne.s32.totalorder %s195, %s197
      %p201 = scmp.eq.s32.totalorder %s25, 0
      %p202 = por %p200, %p201
      %p203 = scmp.ne.s32.totalorder %s195, %s197
      %p204 = scmp.eq.s32.totalorder %s30, 3
      %p205 = por %p203, %p204
      %p206 = scmp.ne.s32.totalorder %s197, %s198
      %p207 = scmp.eq.s32.totalorder %s30, 0
      %p208 = por %p206, %p207
      %p209 = scmp.ne.s32.totalorder %s197, %s198
      %p210 = scmp.eq.s32.totalorder %s31, 3
      %p211 = por %p209, %p210
      %p213 = scmp.ne.s32.totalorder %s198, %s212
      %p214 = scmp.eq.s32.totalorder %s31, 0
      %p215 = por %p213, %p214
      %s217 = sadd.s32 %s216, 1
      %p220 = scmp.eq.s32.totalorder %s25, 3
      %p221 = scmp.ne.s32.totalorder %s216, %s218
      %p222 = scmp.eq.s32.totalorder %s25, 0
      %p223 = por %p221, %p222
      %p224 = scmp.ne.s32.totalorder %s216, %s218
      %p225 = scmp.eq.s32.totalorder %s30, 3
      %p226 = por %p224, %p225
      %p227 = scmp.ne.s32.totalorder %s218, %s219
      %p228 = scmp.eq.s32.totalorder %s30, 0
      %p229 = por %p227, %p228
      %p230 = scmp.ne.s32.totalorder %s218, %s219
      %p231 = scmp.eq.s32.totalorder %s31, 3
      %p232 = por %p230, %p231
      %p234 = scmp.ne.s32.totalorder %s219, %s233
      %p235 = scmp.eq.s32.totalorder %s31, 0
      %p236 = por %p234, %p235
      %p237 = scmp.le.s32.totalorder 1, %s25
      %p238 = scmp.lt.s32.totalorder %s25, 5
      %p239 = pnand %p237, %p238
      %p240 = pneg %p239
      // Predicated region
      $region9: #{tpu_custom_call.1} parent=5 // pred_check
        _
      $region10: #{tpu_custom_call.1} parent=5 // pred_check_branch
        %242 = sbr.rel (%p239) target = $region12
      $region11: #{tpu_custom_call.1} parent=5 // pred_region
        %s243 = ssub.s32 %s25, 1
        // Predicated region
        $region13: #{tpu_custom_call.1} parent=11 // pred_check
          %p244 = pneg %p46
        $region14: #{tpu_custom_call.1} parent=11 // pred_check_branch
          %246 = sbr.rel (%p244) target = $region16
        $region15: #{tpu_custom_call.1} parent=11 // pred_region
          %248 = vsyncadd [#allocation4], 0
          %s250 = sshll.u32 %s0, 4
          %s251 = int_to_ptr.hbm [resolvable:$true] %s250
          %s252 = sshll.u32 [#allocation3], 4
          %s253 = int_to_ptr.vmem [resolvable:$true] %s252
          %255 = dma.hbm_to_vmem [thread:$0]  %s251, 1024, %s253, [#allocation4]
        $region16: #{tpu_custom_call.1} parent=11 // pred_fallthru
          _
        // Predicated region
        $region17: #{tpu_custom_call.1} parent=11 // pred_check
          %p256 = pneg %p145
        $region18: #{tpu_custom_call.1} parent=11 // pred_check_branch
          %258 = sbr.rel (%p256) target = $region20
        $region19: #{tpu_custom_call.1} parent=11 // pred_region
          %260 = vsyncadd [#allocation10], 0
          %s262 = sshll.u32 %s4, 4
          %s263 = int_to_ptr.hbm [resolvable:$true] %s262
          %s264 = sshll.u32 [#allocation11], 4
          %s265 = int_to_ptr.vmem [resolvable:$true] %s264
          %267 = dma.hbm_to_vmem [thread:$0]  %s263, 80, %s265, [#allocation10]
        $region20: #{tpu_custom_call.1} parent=11 // pred_fallthru
          _
        // Predicated region
        $region21: #{tpu_custom_call.1} parent=11 // pred_check
          %p268 = pneg %p166
        $region22: #{tpu_custom_call.1} parent=11 // pred_check_branch
          %270 = sbr.rel (%p268) target = $region24
        $region23: #{tpu_custom_call.1} parent=11 // pred_region
          %272 = vsyncadd [#allocation13], 0
          %s273 = sshll.u32 %s5, 4
          %s274 = int_to_ptr.hbm [resolvable:$true] %s273
          %s275 = sshll.u32 [#allocation12], 4
          %s276 = int_to_ptr.vmem [resolvable:$true] %s275
          %281 = dma.hbm_to_vmem [thread:$0]  %s274, 4096, %s276, [#allocation13], 64, 64, 4
        $region24: #{tpu_custom_call.1} parent=11 // pred_fallthru
          _
        // Predicated region
        $region25: #{tpu_custom_call.1} parent=11 // pred_check
          %p282 = pneg %p187
        $region26: #{tpu_custom_call.1} parent=11 // pred_check_branch
          %284 = sbr.rel (%p282) target = $region28
        $region27: #{tpu_custom_call.1} parent=11 // pred_region
          %286 = vsyncadd [#allocation13], 0
          %s288 = sshll.u32 %s6, 4
          %s289 = int_to_ptr.hbm [resolvable:$true] %s288
          %s290 = sshll.u32 [#allocation14], 4
          %s291 = int_to_ptr.vmem [resolvable:$true] %s290
          %293 = dma.hbm_to_vmem [thread:$0]  %s289, 16, %s291, [#allocation13]
        $region28: #{tpu_custom_call.1} parent=11 // pred_fallthru
          _
      $region12: #{tpu_custom_call.1} parent=5 // pred_fallthru
        _
      %p294 = scmp.lt.s32.totalorder %s25, 4
      // Predicated region
      $region29: #{tpu_custom_call.1} parent=5 // pred_check
        %p295 = pneg %p294
      $region30: #{tpu_custom_call.1} parent=5 // pred_check_branch
        %297 = sbr.rel (%p295) target = $region32
      $region31: #{tpu_custom_call.1} parent=5 // pred_region
        // Predicated region
        $region33: #{tpu_custom_call.1} parent=31 // pred_check
          %p298 = pneg %p66
        $region34: #{tpu_custom_call.1} parent=31 // pred_check_branch
          %300 = sbr.rel (%p298) target = $region36
        $region35: #{tpu_custom_call.1} parent=31 // pred_region
          %s301 = sand.u32 %s25, 1
          %s302 = scalar_lea.sflag [#allocation7], %s301
          %s303 = sand.u32 %s56, 1
          %s304 = smul.addr %s303, 2048
          %s305 = scalar_lea.vmem [#allocation6], %s304
          %s306 = smul.u32 2, %s25
          %308 = vsyncadd %s302, 0
          %s309 = smul.addr %s306, 4
          %s310 = scalar_lea.hbm %s1, %s309
          %s311 = sshll.u32 %s310, 4
          %s312 = int_to_ptr.hbm [resolvable:$true] %s311
          %s313 = sshll.u32 %s305, 4
          %s314 = int_to_ptr.vmem [resolvable:$true] %s313
          %319 = dma.hbm_to_vmem [thread:$0]  %s312, 32768, %s314, %s302, 512, 128, 8
        $region36: #{tpu_custom_call.1} parent=31 // pred_fallthru
          _
        // Predicated region
        $region37: #{tpu_custom_call.1} parent=31 // pred_check
          %p320 = pneg %p92
        $region38: #{tpu_custom_call.1} parent=31 // pred_check_branch
          %322 = sbr.rel (%p320) target = $region40
        $region39: #{tpu_custom_call.1} parent=31 // pred_region
          %s323 = sand.u32 %s25, 1
          %s324 = scalar_lea.sflag [#allocation7], %s323
          %s325 = sand.u32 %s82, 1
          %s326 = smul.addr %s325, 2
          %s327 = scalar_lea.vmem [#allocation8], %s326
          %s328 = smul.u32 2, %s25
          %330 = vsyncadd %s324, 0
          %s331 = scalar_lea.hbm %s2, %s328
          %s333 = sshll.u32 %s331, 4
          %s334 = int_to_ptr.hbm [resolvable:$true] %s333
          %s335 = sshll.u32 %s327, 4
          %s336 = int_to_ptr.vmem [resolvable:$true] %s335
          %338 = dma.hbm_to_vmem [thread:$0]  %s334, 32, %s336, %s324
        $region40: #{tpu_custom_call.1} parent=31 // pred_fallthru
          _
        // Predicated region
        $region41: #{tpu_custom_call.1} parent=31 // pred_check
          %p339 = pneg %p118
        $region42: #{tpu_custom_call.1} parent=31 // pred_check_branch
          %341 = sbr.rel (%p339) target = $region44
        $region43: #{tpu_custom_call.1} parent=31 // pred_region
          %s342 = sand.u32 %s25, 1
          %s343 = scalar_lea.sflag [#allocation10], %s342
          %s344 = sand.u32 %s108, 1
          %s345 = smul.addr %s344, 640
          %s346 = scalar_lea.vmem [#allocation9], %s345
          %s347 = smul.u32 32, %s25
          %349 = vsyncadd %s343, 0
          %s350 = smul.addr %s347, 5
          %s351 = smul.addr %s350, 4
          %s352 = scalar_lea.hbm %s3, %s351
          %s353 = sshll.u32 %s352, 4
          %s354 = int_to_ptr.hbm [resolvable:$true] %s353
          %s355 = sshll.u32 %s346, 4
          %s356 = int_to_ptr.vmem [resolvable:$true] %s355
          %361 = dma.hbm_to_vmem [thread:$0]  %s354, 10240, %s356, %s343, 320, 320, 20
        $region44: #{tpu_custom_call.1} parent=31 // pred_fallthru
          _
      $region32: #{tpu_custom_call.1} parent=5 // pred_fallthru
        _
      %p362 = scmp.le.s32.totalorder 1, %s25
      %p363 = scmp.lt.s32.totalorder %s25, 5
      %p364 = pnand %p362, %p363
      %p365 = pneg %p364
      // Predicated region
      $region45: #{tpu_custom_call.1} parent=5 // pred_check
        _
      $region46: #{tpu_custom_call.1} parent=5 // pred_check_branch
        %367 = sbr.rel (%p364) target = $region48
      $region47: #{tpu_custom_call.1} parent=5 // pred_region
        %s368 = ssub.s32 %s25, 1
        // Predicated region
        $region49: #{tpu_custom_call.1} parent=47 // pred_check
          %p369 = pneg %p46
        $region50: #{tpu_custom_call.1} parent=47 // pred_check_branch
          %371 = sbr.rel (%p369) target = $region52
        $region51: #{tpu_custom_call.1} parent=47 // pred_region
          %373 = dma.done [#allocation4], 1024
        $region52: #{tpu_custom_call.1} parent=47 // pred_fallthru
          _
        %s374 = sand.u32 %s30, 1
        %s375 = scalar_lea.sflag [#allocation7], %s374
        %s376 = sand.u32 %s59, 1
        %s377 = smul.addr %s376, 2048
        %s378 = scalar_lea.vmem [#allocation6], %s377
        // Predicated region
        $region53: #{tpu_custom_call.1} parent=47 // pred_check
          %p379 = pneg %p72
        $region54: #{tpu_custom_call.1} parent=47 // pred_check_branch
          %381 = sbr.rel (%p379) target = $region56
        $region55: #{tpu_custom_call.1} parent=47 // pred_region
          %383 = dma.done %s375, 32768
        $region56: #{tpu_custom_call.1} parent=47 // pred_fallthru
          _
        %s384 = sand.u32 %s30, 1
        %s385 = scalar_lea.sflag [#allocation7], %s384
        %s386 = sand.u32 %s85, 1
        %s387 = smul.addr %s386, 2
        %s388 = scalar_lea.vmem [#allocation8], %s387
        // Predicated region
        $region57: #{tpu_custom_call.1} parent=47 // pred_check
          %p389 = pneg %p98
        $region58: #{tpu_custom_call.1} parent=47 // pred_check_branch
          %391 = sbr.rel (%p389) target = $region60
        $region59: #{tpu_custom_call.1} parent=47 // pred_region
          %393 = dma.done %s385, 32
        $region60: #{tpu_custom_call.1} parent=47 // pred_fallthru
          _
        %s394 = sand.u32 %s30, 1
        %s395 = scalar_lea.sflag [#allocation10], %s394
        %s396 = sand.u32 %s111, 1
        %s397 = smul.addr %s396, 640
        %s398 = scalar_lea.vmem [#allocation9], %s397
        // Predicated region
        $region61: #{tpu_custom_call.1} parent=47 // pred_check
          %p399 = pneg %p124
        $region62: #{tpu_custom_call.1} parent=47 // pred_check_branch
          %401 = sbr.rel (%p399) target = $region64
        $region63: #{tpu_custom_call.1} parent=47 // pred_region
          %403 = dma.done %s395, 10240
        $region64: #{tpu_custom_call.1} parent=47 // pred_fallthru
          _
        // Predicated region
        $region65: #{tpu_custom_call.1} parent=47 // pred_check
          %p404 = pneg %p145
        $region66: #{tpu_custom_call.1} parent=47 // pred_check_branch
          %406 = sbr.rel (%p404) target = $region68
        $region67: #{tpu_custom_call.1} parent=47 // pred_region
          %408 = dma.done [#allocation10], 80
        $region68: #{tpu_custom_call.1} parent=47 // pred_fallthru
          _
        // Predicated region
        $region69: #{tpu_custom_call.1} parent=47 // pred_check
          %p409 = pneg %p166
        $region70: #{tpu_custom_call.1} parent=47 // pred_check_branch
          %411 = sbr.rel (%p409) target = $region72
        $region71: #{tpu_custom_call.1} parent=47 // pred_region
          %413 = dma.done [#allocation13], 4096
        $region72: #{tpu_custom_call.1} parent=47 // pred_fallthru
          _
        // Predicated region
        $region73: #{tpu_custom_call.1} parent=47 // pred_check
          %p414 = pneg %p187
        $region74: #{tpu_custom_call.1} parent=47 // pred_check_branch
          %416 = sbr.rel (%p414) target = $region76
        $region75: #{tpu_custom_call.1} parent=47 // pred_region
          %418 = dma.done [#allocation13], 16
        $region76: #{tpu_custom_call.1} parent=47 // pred_fallthru
          _
        %p419 = pneg %p46
        %p420 = pneg %p43
        %s421 = sand.u32 %s30, 1
        %s422 = scalar_lea.sflag [#allocation7], %s421
        %s423 = sand.u32 %s59, 1
        %s424 = smul.addr %s423, 2048
        %s425 = scalar_lea.vmem [#allocation6], %s424
        %p426 = pneg %p72
        %p427 = pneg %p69
        %s428 = sand.u32 %s30, 1
        %s429 = scalar_lea.sflag [#allocation7], %s428
        %s430 = sand.u32 %s85, 1
        %s431 = smul.addr %s430, 2
        %s432 = scalar_lea.vmem [#allocation8], %s431
        %p433 = pneg %p98
        %p434 = pneg %p95
        %s435 = sand.u32 %s30, 1
        %s436 = scalar_lea.sflag [#allocation10], %s435
        %s437 = sand.u32 %s111, 1
        %s438 = smul.addr %s437, 640
        %s439 = scalar_lea.vmem [#allocation9], %s438
        %p440 = pneg %p124
        %p441 = pneg %p121
        %p442 = pneg %p145
        %p443 = pneg %p142
        %p444 = pneg %p166
        %p445 = pneg %p163
        %p446 = pneg %p187
        %p447 = pneg %p184
        %p448 = pneg %p208
        %p449 = pneg %p205
        %p450 = pneg %p229
        %p451 = pneg %p226
        %s452 = smul.u32 2, %s30
        %s453 = smul.u32 2, %s30
        %s454 = smul.u32 32, %s30
        %p455 = scmp.eq.s32.totalorder %s30, 0
        // Predicated region
        $region77: #{tpu_custom_call.1} parent=47 // pred_check
          %p456 = pneg %p455
        $region78: #{tpu_custom_call.1} parent=47 // pred_check_branch
          %458 = sbr.rel (%p456) target = $region80
        $region79: #{tpu_custom_call.1} parent=47 // pred_region
          %459 = vst [vmem:[#allocation2] sm:$0xff] 0.0
          %460 = vst [vmem:[#allocation2 + $0x8] sm:$0xff] 0.0
          %461 = vst [vmem:[#allocation2 + $0x10] sm:$0xff] 0.0
          %462 = vst [vmem:[#allocation2 + $0x18] sm:$0xff] 0.0
          %463 = vst [vmem:[#allocation2 + $0x20] sm:$0xff] 0.0
        $region80: #{tpu_custom_call.1} parent=47 // pred_fallthru
          _
        %v464 = vld [vmem:[#allocation3] sm:$0xff]
        %v465 = vld [vmem:[#allocation3 + $0x8] sm:$0xff]
        %v466 = vld [vmem:[#allocation3 + $0x10] sm:$0xff]
        %v467 = vld [vmem:[#allocation3 + $0x18] sm:$0xff]
        %v468 = vld [vmem:[#allocation3 + $0x20] sm:$0xff]
        %v469 = vld [vmem:[#allocation3 + $0x28] sm:$0xff]
        %v470 = vld [vmem:[#allocation3 + $0x30] sm:$0xff]
        %v471 = vld [vmem:[#allocation3 + $0x38] sm:$0xff]
        %v472 = vld [vmem:[%s378] sm:$0xff]
        %v473 = vld [vmem:[%s378 + $0x8] sm:$0xff]
        %v474 = vld [vmem:[%s378 + $0x10] sm:$0xff]
        %v475 = vld [vmem:[%s378 + $0x18] sm:$0xff]
        %v476 = vld [vmem:[%s378 + $0x20] sm:$0xff]
        %v477 = vld [vmem:[%s378 + $0x28] sm:$0xff]
        %v478 = vld [vmem:[%s378 + $0x30] sm:$0xff]
        %v479 = vld [vmem:[%s378 + $0x38] sm:$0xff]
        %v480 = vld [vmem:[%s378 + $0x40] sm:$0xff]
        %v481 = vld [vmem:[%s378 + $0x48] sm:$0xff]
        %v482 = vld [vmem:[%s378 + $0x50] sm:$0xff]
        %v483 = vld [vmem:[%s378 + $0x58] sm:$0xff]
        %v484 = vld [vmem:[%s378 + $0x60] sm:$0xff]
        %v485 = vld [vmem:[%s378 + $0x68] sm:$0xff]
        %v486 = vld [vmem:[%s378 + $0x70] sm:$0xff]
        %v487 = vld [vmem:[%s378 + $0x78] sm:$0xff]
        %v488 = vld [vmem:[%s378 + $0x80] sm:$0xff]
        %v489 = vld [vmem:[%s378 + $0x88] sm:$0xff]
        %v490 = vld [vmem:[%s378 + $0x90] sm:$0xff]
        %v491 = vld [vmem:[%s378 + $0x98] sm:$0xff]
        %v492 = vld [vmem:[%s378 + $0xa0] sm:$0xff]
        %v493 = vld [vmem:[%s378 + $0xa8] sm:$0xff]
        %v494 = vld [vmem:[%s378 + $0xb0] sm:$0xff]
        %v495 = vld [vmem:[%s378 + $0xb8] sm:$0xff]
        %v496 = vld [vmem:[%s378 + $0xc0] sm:$0xff]
        %v497 = vld [vmem:[%s378 + $0xc8] sm:$0xff]
        %v498 = vld [vmem:[%s378 + $0xd0] sm:$0xff]
        %v499 = vld [vmem:[%s378 + $0xd8] sm:$0xff]
        %v500 = vld [vmem:[%s378 + $0xe0] sm:$0xff]
        %v501 = vld [vmem:[%s378 + $0xe8] sm:$0xff]
        %v502 = vld [vmem:[%s378 + $0xf0] sm:$0xff]
        %v503 = vld [vmem:[%s378 + $0xf8] sm:$0xff]
        %v504 = vld [vmem:[%s378 + $0x100] sm:$0xff]
        %v505 = vld [vmem:[%s378 + $0x108] sm:$0xff]
        %v506 = vld [vmem:[%s378 + $0x110] sm:$0xff]
        %v507 = vld [vmem:[%s378 + $0x118] sm:$0xff]
        %v508 = vld [vmem:[%s378 + $0x120] sm:$0xff]
        %v509 = vld [vmem:[%s378 + $0x128] sm:$0xff]
        %v510 = vld [vmem:[%s378 + $0x130] sm:$0xff]
        %v511 = vld [vmem:[%s378 + $0x138] sm:$0xff]
        %v512 = vld [vmem:[%s378 + $0x140] sm:$0xff]
        %v513 = vld [vmem:[%s378 + $0x148] sm:$0xff]
        %v514 = vld [vmem:[%s378 + $0x150] sm:$0xff]
        %v515 = vld [vmem:[%s378 + $0x158] sm:$0xff]
        %v516 = vld [vmem:[%s378 + $0x160] sm:$0xff]
        %v517 = vld [vmem:[%s378 + $0x168] sm:$0xff]
        %v518 = vld [vmem:[%s378 + $0x170] sm:$0xff]
        %v519 = vld [vmem:[%s378 + $0x178] sm:$0xff]
        %v520 = vld [vmem:[%s378 + $0x180] sm:$0xff]
        %v521 = vld [vmem:[%s378 + $0x188] sm:$0xff]
        %v522 = vld [vmem:[%s378 + $0x190] sm:$0xff]
        %v523 = vld [vmem:[%s378 + $0x198] sm:$0xff]
        %v524 = vld [vmem:[%s378 + $0x1a0] sm:$0xff]
        %v525 = vld [vmem:[%s378 + $0x1a8] sm:$0xff]
        %v526 = vld [vmem:[%s378 + $0x1b0] sm:$0xff]
        %v527 = vld [vmem:[%s378 + $0x1b8] sm:$0xff]
        %v528 = vld [vmem:[%s378 + $0x1c0] sm:$0xff]
        %v529 = vld [vmem:[%s378 + $0x1c8] sm:$0xff]
        %v530 = vld [vmem:[%s378 + $0x1d0] sm:$0xff]
        %v531 = vld [vmem:[%s378 + $0x1d8] sm:$0xff]
        %v532 = vld [vmem:[%s378 + $0x1e0] sm:$0xff]
        %v533 = vld [vmem:[%s378 + $0x1e8] sm:$0xff]
        %v534 = vld [vmem:[%s378 + $0x1f0] sm:$0xff]
        %v535 = vld [vmem:[%s378 + $0x1f8] sm:$0xff]
        %v536 = vld [vmem:[%s378 + $0x200] sm:$0xff]
        %v537 = vld [vmem:[%s378 + $0x208] sm:$0xff]
        %v538 = vld [vmem:[%s378 + $0x210] sm:$0xff]
        %v539 = vld [vmem:[%s378 + $0x218] sm:$0xff]
        %v540 = vld [vmem:[%s378 + $0x220] sm:$0xff]
        %v541 = vld [vmem:[%s378 + $0x228] sm:$0xff]
        %v542 = vld [vmem:[%s378 + $0x230] sm:$0xff]
        %v543 = vld [vmem:[%s378 + $0x238] sm:$0xff]
        %v544 = vld [vmem:[%s378 + $0x240] sm:$0xff]
        %v545 = vld [vmem:[%s378 + $0x248] sm:$0xff]
        %v546 = vld [vmem:[%s378 + $0x250] sm:$0xff]
        %v547 = vld [vmem:[%s378 + $0x258] sm:$0xff]
        %v548 = vld [vmem:[%s378 + $0x260] sm:$0xff]
        %v549 = vld [vmem:[%s378 + $0x268] sm:$0xff]
        %v550 = vld [vmem:[%s378 + $0x270] sm:$0xff]
        %v551 = vld [vmem:[%s378 + $0x278] sm:$0xff]
        %v552 = vld [vmem:[%s378 + $0x280] sm:$0xff]
        %v553 = vld [vmem:[%s378 + $0x288] sm:$0xff]
        %v554 = vld [vmem:[%s378 + $0x290] sm:$0xff]
        %v555 = vld [vmem:[%s378 + $0x298] sm:$0xff]
        %v556 = vld [vmem:[%s378 + $0x2a0] sm:$0xff]
        %v557 = vld [vmem:[%s378 + $0x2a8] sm:$0xff]
        %v558 = vld [vmem:[%s378 + $0x2b0] sm:$0xff]
        %v559 = vld [vmem:[%s378 + $0x2b8] sm:$0xff]
        %v560 = vld [vmem:[%s378 + $0x2c0] sm:$0xff]
        %v561 = vld [vmem:[%s378 + $0x2c8] sm:$0xff]
        %v562 = vld [vmem:[%s378 + $0x2d0] sm:$0xff]
        %v563 = vld [vmem:[%s378 + $0x2d8] sm:$0xff]
        %v564 = vld [vmem:[%s378 + $0x2e0] sm:$0xff]
        %v565 = vld [vmem:[%s378 + $0x2e8] sm:$0xff]
        %v566 = vld [vmem:[%s378 + $0x2f0] sm:$0xff]
        %v567 = vld [vmem:[%s378 + $0x2f8] sm:$0xff]
        %v568 = vld [vmem:[%s378 + $0x300] sm:$0xff]
        %v569 = vld [vmem:[%s378 + $0x308] sm:$0xff]
        %v570 = vld [vmem:[%s378 + $0x310] sm:$0xff]
        %v571 = vld [vmem:[%s378 + $0x318] sm:$0xff]
        %v572 = vld [vmem:[%s378 + $0x320] sm:$0xff]
        %v573 = vld [vmem:[%s378 + $0x328] sm:$0xff]
        %v574 = vld [vmem:[%s378 + $0x330] sm:$0xff]
        %v575 = vld [vmem:[%s378 + $0x338] sm:$0xff]
        %v576 = vld [vmem:[%s378 + $0x340] sm:$0xff]
        %v577 = vld [vmem:[%s378 + $0x348] sm:$0xff]
        %v578 = vld [vmem:[%s378 + $0x350] sm:$0xff]
        %v579 = vld [vmem:[%s378 + $0x358] sm:$0xff]
        %v580 = vld [vmem:[%s378 + $0x360] sm:$0xff]
        %v581 = vld [vmem:[%s378 + $0x368] sm:$0xff]
        %v582 = vld [vmem:[%s378 + $0x370] sm:$0xff]
        %v583 = vld [vmem:[%s378 + $0x378] sm:$0xff]
        %v584 = vld [vmem:[%s378 + $0x380] sm:$0xff]
        %v585 = vld [vmem:[%s378 + $0x388] sm:$0xff]
        %v586 = vld [vmem:[%s378 + $0x390] sm:$0xff]
        %v587 = vld [vmem:[%s378 + $0x398] sm:$0xff]
        %v588 = vld [vmem:[%s378 + $0x3a0] sm:$0xff]
        %v589 = vld [vmem:[%s378 + $0x3a8] sm:$0xff]
        %v590 = vld [vmem:[%s378 + $0x3b0] sm:$0xff]
        %v591 = vld [vmem:[%s378 + $0x3b8] sm:$0xff]
        %v592 = vld [vmem:[%s378 + $0x3c0] sm:$0xff]
        %v593 = vld [vmem:[%s378 + $0x3c8] sm:$0xff]
        %v594 = vld [vmem:[%s378 + $0x3d0] sm:$0xff]
        %v595 = vld [vmem:[%s378 + $0x3d8] sm:$0xff]
        %v596 = vld [vmem:[%s378 + $0x3e0] sm:$0xff]
        %v597 = vld [vmem:[%s378 + $0x3e8] sm:$0xff]
        %v598 = vld [vmem:[%s378 + $0x3f0] sm:$0xff]
        %v599 = vld [vmem:[%s378 + $0x3f8] sm:$0xff]
        %v600 = vld [vmem:[%s378 + $0x400] sm:$0xff]
        %v601 = vld [vmem:[%s378 + $0x408] sm:$0xff]
        %v602 = vld [vmem:[%s378 + $0x410] sm:$0xff]
        %v603 = vld [vmem:[%s378 + $0x418] sm:$0xff]
        %v604 = vld [vmem:[%s378 + $0x420] sm:$0xff]
        %v605 = vld [vmem:[%s378 + $0x428] sm:$0xff]
        %v606 = vld [vmem:[%s378 + $0x430] sm:$0xff]
        %v607 = vld [vmem:[%s378 + $0x438] sm:$0xff]
        %v608 = vld [vmem:[%s378 + $0x440] sm:$0xff]
        %v609 = vld [vmem:[%s378 + $0x448] sm:$0xff]
        %v610 = vld [vmem:[%s378 + $0x450] sm:$0xff]
        %v611 = vld [vmem:[%s378 + $0x458] sm:$0xff]
        %v612 = vld [vmem:[%s378 + $0x460] sm:$0xff]
        %v613 = vld [vmem:[%s378 + $0x468] sm:$0xff]
        %v614 = vld [vmem:[%s378 + $0x470] sm:$0xff]
        %v615 = vld [vmem:[%s378 + $0x478] sm:$0xff]
        %v616 = vld [vmem:[%s378 + $0x480] sm:$0xff]
        %v617 = vld [vmem:[%s378 + $0x488] sm:$0xff]
        %v618 = vld [vmem:[%s378 + $0x490] sm:$0xff]
        %v619 = vld [vmem:[%s378 + $0x498] sm:$0xff]
        %v620 = vld [vmem:[%s378 + $0x4a0] sm:$0xff]
        %v621 = vld [vmem:[%s378 + $0x4a8] sm:$0xff]
        %v622 = vld [vmem:[%s378 + $0x4b0] sm:$0xff]
        %v623 = vld [vmem:[%s378 + $0x4b8] sm:$0xff]
        %v624 = vld [vmem:[%s378 + $0x4c0] sm:$0xff]
        %v625 = vld [vmem:[%s378 + $0x4c8] sm:$0xff]
        %v626 = vld [vmem:[%s378 + $0x4d0] sm:$0xff]
        %v627 = vld [vmem:[%s378 + $0x4d8] sm:$0xff]
        %v628 = vld [vmem:[%s378 + $0x4e0] sm:$0xff]
        %v629 = vld [vmem:[%s378 + $0x4e8] sm:$0xff]
        %v630 = vld [vmem:[%s378 + $0x4f0] sm:$0xff]
        %v631 = vld [vmem:[%s378 + $0x4f8] sm:$0xff]
        %v632 = vld [vmem:[%s378 + $0x500] sm:$0xff]
        %v633 = vld [vmem:[%s378 + $0x508] sm:$0xff]
        %v634 = vld [vmem:[%s378 + $0x510] sm:$0xff]
        %v635 = vld [vmem:[%s378 + $0x518] sm:$0xff]
        %v636 = vld [vmem:[%s378 + $0x520] sm:$0xff]
        %v637 = vld [vmem:[%s378 + $0x528] sm:$0xff]
        %v638 = vld [vmem:[%s378 + $0x530] sm:$0xff]
        %v639 = vld [vmem:[%s378 + $0x538] sm:$0xff]
        %v640 = vld [vmem:[%s378 + $0x540] sm:$0xff]
        %v641 = vld [vmem:[%s378 + $0x548] sm:$0xff]
        %v642 = vld [vmem:[%s378 + $0x550] sm:$0xff]
        %v643 = vld [vmem:[%s378 + $0x558] sm:$0xff]
        %v644 = vld [vmem:[%s378 + $0x560] sm:$0xff]
        %v645 = vld [vmem:[%s378 + $0x568] sm:$0xff]
        %v646 = vld [vmem:[%s378 + $0x570] sm:$0xff]
        %v647 = vld [vmem:[%s378 + $0x578] sm:$0xff]
        %v648 = vld [vmem:[%s378 + $0x580] sm:$0xff]
        %v649 = vld [vmem:[%s378 + $0x588] sm:$0xff]
        %v650 = vld [vmem:[%s378 + $0x590] sm:$0xff]
        %v651 = vld [vmem:[%s378 + $0x598] sm:$0xff]
        %v652 = vld [vmem:[%s378 + $0x5a0] sm:$0xff]
        %v653 = vld [vmem:[%s378 + $0x5a8] sm:$0xff]
        %v654 = vld [vmem:[%s378 + $0x5b0] sm:$0xff]
        %v655 = vld [vmem:[%s378 + $0x5b8] sm:$0xff]
        %v656 = vld [vmem:[%s378 + $0x5c0] sm:$0xff]
        %v657 = vld [vmem:[%s378 + $0x5c8] sm:$0xff]
        %v658 = vld [vmem:[%s378 + $0x5d0] sm:$0xff]
        %v659 = vld [vmem:[%s378 + $0x5d8] sm:$0xff]
        %v660 = vld [vmem:[%s378 + $0x5e0] sm:$0xff]
        %v661 = vld [vmem:[%s378 + $0x5e8] sm:$0xff]
        %v662 = vld [vmem:[%s378 + $0x5f0] sm:$0xff]
        %v663 = vld [vmem:[%s378 + $0x5f8] sm:$0xff]
        %v664 = vld [vmem:[%s378 + $0x600] sm:$0xff]
        %v665 = vld [vmem:[%s378 + $0x608] sm:$0xff]
        %v666 = vld [vmem:[%s378 + $0x610] sm:$0xff]
        %v667 = vld [vmem:[%s378 + $0x618] sm:$0xff]
        %v668 = vld [vmem:[%s378 + $0x620] sm:$0xff]
        %v669 = vld [vmem:[%s378 + $0x628] sm:$0xff]
        %v670 = vld [vmem:[%s378 + $0x630] sm:$0xff]
        %v671 = vld [vmem:[%s378 + $0x638] sm:$0xff]
        %v672 = vld [vmem:[%s378 + $0x640] sm:$0xff]
        %v673 = vld [vmem:[%s378 + $0x648] sm:$0xff]
        %v674 = vld [vmem:[%s378 + $0x650] sm:$0xff]
        %v675 = vld [vmem:[%s378 + $0x658] sm:$0xff]
        %v676 = vld [vmem:[%s378 + $0x660] sm:$0xff]
        %v677 = vld [vmem:[%s378 + $0x668] sm:$0xff]
        %v678 = vld [vmem:[%s378 + $0x670] sm:$0xff]
        %v679 = vld [vmem:[%s378 + $0x678] sm:$0xff]
        %v680 = vld [vmem:[%s378 + $0x680] sm:$0xff]
        %v681 = vld [vmem:[%s378 + $0x688] sm:$0xff]
        %v682 = vld [vmem:[%s378 + $0x690] sm:$0xff]
        %v683 = vld [vmem:[%s378 + $0x698] sm:$0xff]
        %v684 = vld [vmem:[%s378 + $0x6a0] sm:$0xff]
        %v685 = vld [vmem:[%s378 + $0x6a8] sm:$0xff]
        %v686 = vld [vmem:[%s378 + $0x6b0] sm:$0xff]
        %v687 = vld [vmem:[%s378 + $0x6b8] sm:$0xff]
        %v688 = vld [vmem:[%s378 + $0x6c0] sm:$0xff]
        %v689 = vld [vmem:[%s378 + $0x6c8] sm:$0xff]
        %v690 = vld [vmem:[%s378 + $0x6d0] sm:$0xff]
        %v691 = vld [vmem:[%s378 + $0x6d8] sm:$0xff]
        %v692 = vld [vmem:[%s378 + $0x6e0] sm:$0xff]
        %v693 = vld [vmem:[%s378 + $0x6e8] sm:$0xff]
        %v694 = vld [vmem:[%s378 + $0x6f0] sm:$0xff]
        %v695 = vld [vmem:[%s378 + $0x6f8] sm:$0xff]
        %v696 = vld [vmem:[%s378 + $0x700] sm:$0xff]
        %v697 = vld [vmem:[%s378 + $0x708] sm:$0xff]
        %v698 = vld [vmem:[%s378 + $0x710] sm:$0xff]
        %v699 = vld [vmem:[%s378 + $0x718] sm:$0xff]
        %v700 = vld [vmem:[%s378 + $0x720] sm:$0xff]
        %v701 = vld [vmem:[%s378 + $0x728] sm:$0xff]
        %v702 = vld [vmem:[%s378 + $0x730] sm:$0xff]
        %v703 = vld [vmem:[%s378 + $0x738] sm:$0xff]
        %v704 = vld [vmem:[%s378 + $0x740] sm:$0xff]
        %v705 = vld [vmem:[%s378 + $0x748] sm:$0xff]
        %v706 = vld [vmem:[%s378 + $0x750] sm:$0xff]
        %v707 = vld [vmem:[%s378 + $0x758] sm:$0xff]
        %v708 = vld [vmem:[%s378 + $0x760] sm:$0xff]
        %v709 = vld [vmem:[%s378 + $0x768] sm:$0xff]
        %v710 = vld [vmem:[%s378 + $0x770] sm:$0xff]
        %v711 = vld [vmem:[%s378 + $0x778] sm:$0xff]
        %v712 = vld [vmem:[%s378 + $0x780] sm:$0xff]
        %v713 = vld [vmem:[%s378 + $0x788] sm:$0xff]
        %v714 = vld [vmem:[%s378 + $0x790] sm:$0xff]
        %v715 = vld [vmem:[%s378 + $0x798] sm:$0xff]
        %v716 = vld [vmem:[%s378 + $0x7a0] sm:$0xff]
        %v717 = vld [vmem:[%s378 + $0x7a8] sm:$0xff]
        %v718 = vld [vmem:[%s378 + $0x7b0] sm:$0xff]
        %v719 = vld [vmem:[%s378 + $0x7b8] sm:$0xff]
        %v720 = vld [vmem:[%s378 + $0x7c0] sm:$0xff]
        %v721 = vld [vmem:[%s378 + $0x7c8] sm:$0xff]
        %v722 = vld [vmem:[%s378 + $0x7d0] sm:$0xff]
        %v723 = vld [vmem:[%s378 + $0x7d8] sm:$0xff]
        %v724 = vld [vmem:[%s378 + $0x7e0] sm:$0xff]
        %v725 = vld [vmem:[%s378 + $0x7e8] sm:$0xff]
        %v726 = vld [vmem:[%s378 + $0x7f0] sm:$0xff]
        %v727 = vld [vmem:[%s378 + $0x7f8] sm:$0xff]
        %v728 = vld [vmem:[%s388] sm:$0x3]
        %v730 = vperm.slane %v728, 0
        %v731 = vperm.slane %v728, 1
        %v742 = vunpack.c.l.b16 %v464
        %v743 = vunpack.c.h.b16 %v464
        %v744 = vunpack.c.l.b16 %v465
        %v745 = vunpack.c.h.b16 %v465
        %v746 = vunpack.c.l.b16 %v466
        %v747 = vunpack.c.h.b16 %v466
        %v748 = vunpack.c.l.b16 %v467
        %v749 = vunpack.c.h.b16 %v467
        %v750 = vunpack.c.l.b16 %v468
        %v751 = vunpack.c.h.b16 %v468
        %v752 = vunpack.c.l.b16 %v469
        %v753 = vunpack.c.h.b16 %v469
        %v754 = vunpack.c.l.b16 %v470
        %v755 = vunpack.c.h.b16 %v470
        %v756 = vunpack.c.l.b16 %v471
        %v757 = vunpack.c.h.b16 %v471
        %v758 = vpack.c.b16 %v742, %v742
        %v759 = vpack.c.b16 %v743, %v743
        %v760 = vpack.c.b16 %v744, %v744
        %v761 = vpack.c.b16 %v745, %v745
        %v762 = vpack.c.b16 %v746, %v746
        %v763 = vpack.c.b16 %v747, %v747
        %v764 = vpack.c.b16 %v748, %v748
        %v765 = vpack.c.b16 %v749, %v749
        %v766 = vpack.c.b16 %v750, %v750
        %v767 = vpack.c.b16 %v751, %v751
        %v768 = vpack.c.b16 %v752, %v752
        %v769 = vpack.c.b16 %v753, %v753
        %v770 = vpack.c.b16 %v754, %v754
        %v771 = vpack.c.b16 %v755, %v755
        %v772 = vpack.c.b16 %v756, %v756
        %v773 = vpack.c.b16 %v757, %v757
        %v1046 = vunpack.c.l.b16 %v472
        %v1047 = vunpack.c.h.b16 %v472
        %v1048 = vunpack.c.l.b16 %v473
        %v1049 = vunpack.c.h.b16 %v473
        %v1050 = vunpack.c.l.b16 %v474
        %v1051 = vunpack.c.h.b16 %v474
        %v1052 = vunpack.c.l.b16 %v475
        %v1053 = vunpack.c.h.b16 %v475
        %v1054 = vunpack.c.l.b16 %v476
        %v1055 = vunpack.c.h.b16 %v476
        %v1056 = vunpack.c.l.b16 %v477
        %v1057 = vunpack.c.h.b16 %v477
        %v1058 = vunpack.c.l.b16 %v478
        %v1059 = vunpack.c.h.b16 %v478
        %v1060 = vunpack.c.l.b16 %v479
        %v1061 = vunpack.c.h.b16 %v479
        %v1062 = vunpack.c.l.b16 %v480
        %v1063 = vunpack.c.h.b16 %v480
        %v1064 = vunpack.c.l.b16 %v481
        %v1065 = vunpack.c.h.b16 %v481
        %v1066 = vunpack.c.l.b16 %v482
        %v1067 = vunpack.c.h.b16 %v482
        %v1068 = vunpack.c.l.b16 %v483
        %v1069 = vunpack.c.h.b16 %v483
        %v1070 = vunpack.c.l.b16 %v484
        %v1071 = vunpack.c.h.b16 %v484
        %v1072 = vunpack.c.l.b16 %v485
        %v1073 = vunpack.c.h.b16 %v485
        %v1074 = vunpack.c.l.b16 %v486
        %v1075 = vunpack.c.h.b16 %v486
        %v1076 = vunpack.c.l.b16 %v487
        %v1077 = vunpack.c.h.b16 %v487
        %v1078 = vunpack.c.l.b16 %v488
        %v1079 = vunpack.c.h.b16 %v488
        %v1080 = vunpack.c.l.b16 %v489
        %v1081 = vunpack.c.h.b16 %v489
        %v1082 = vunpack.c.l.b16 %v490
        %v1083 = vunpack.c.h.b16 %v490
        %v1084 = vunpack.c.l.b16 %v491
        %v1085 = vunpack.c.h.b16 %v491
        %v1086 = vunpack.c.l.b16 %v492
        %v1087 = vunpack.c.h.b16 %v492
        %v1088 = vunpack.c.l.b16 %v493
        %v1089 = vunpack.c.h.b16 %v493
        %v1090 = vunpack.c.l.b16 %v494
        %v1091 = vunpack.c.h.b16 %v494
        %v1092 = vunpack.c.l.b16 %v495
        %v1093 = vunpack.c.h.b16 %v495
        %v1094 = vunpack.c.l.b16 %v496
        %v1095 = vunpack.c.h.b16 %v496
        %v1096 = vunpack.c.l.b16 %v497
        %v1097 = vunpack.c.h.b16 %v497
        %v1098 = vunpack.c.l.b16 %v498
        %v1099 = vunpack.c.h.b16 %v498
        %v1100 = vunpack.c.l.b16 %v499
        %v1101 = vunpack.c.h.b16 %v499
        %v1102 = vunpack.c.l.b16 %v500
        %v1103 = vunpack.c.h.b16 %v500
        %v1104 = vunpack.c.l.b16 %v501
        %v1105 = vunpack.c.h.b16 %v501
        %v1106 = vunpack.c.l.b16 %v502
        %v1107 = vunpack.c.h.b16 %v502
        %v1108 = vunpack.c.l.b16 %v503
        %v1109 = vunpack.c.h.b16 %v503
        %v1110 = vunpack.c.l.b16 %v504
        %v1111 = vunpack.c.h.b16 %v504
        %v1112 = vunpack.c.l.b16 %v505
        %v1113 = vunpack.c.h.b16 %v505
        %v1114 = vunpack.c.l.b16 %v506
        %v1115 = vunpack.c.h.b16 %v506
        %v1116 = vunpack.c.l.b16 %v507
        %v1117 = vunpack.c.h.b16 %v507
        %v1118 = vunpack.c.l.b16 %v508
        %v1119 = vunpack.c.h.b16 %v508
        %v1120 = vunpack.c.l.b16 %v509
        %v1121 = vunpack.c.h.b16 %v509
        %v1122 = vunpack.c.l.b16 %v510
        %v1123 = vunpack.c.h.b16 %v510
        %v1124 = vunpack.c.l.b16 %v511
        %v1125 = vunpack.c.h.b16 %v511
        %v1126 = vunpack.c.l.b16 %v512
        %v1127 = vunpack.c.h.b16 %v512
        %v1128 = vunpack.c.l.b16 %v513
        %v1129 = vunpack.c.h.b16 %v513
        %v1130 = vunpack.c.l.b16 %v514
        %v1131 = vunpack.c.h.b16 %v514
        %v1132 = vunpack.c.l.b16 %v515
        %v1133 = vunpack.c.h.b16 %v515
        %v1134 = vunpack.c.l.b16 %v516
        %v1135 = vunpack.c.h.b16 %v516
        %v1136 = vunpack.c.l.b16 %v517
        %v1137 = vunpack.c.h.b16 %v517
        %v1138 = vunpack.c.l.b16 %v518
        %v1139 = vunpack.c.h.b16 %v518
        %v1140 = vunpack.c.l.b16 %v519
        %v1141 = vunpack.c.h.b16 %v519
        %v1142 = vunpack.c.l.b16 %v520
        %v1143 = vunpack.c.h.b16 %v520
        %v1144 = vunpack.c.l.b16 %v521
        %v1145 = vunpack.c.h.b16 %v521
        %v1146 = vunpack.c.l.b16 %v522
        %v1147 = vunpack.c.h.b16 %v522
        %v1148 = vunpack.c.l.b16 %v523
        %v1149 = vunpack.c.h.b16 %v523
        %v1150 = vunpack.c.l.b16 %v524
        %v1151 = vunpack.c.h.b16 %v524
        %v1152 = vunpack.c.l.b16 %v525
        %v1153 = vunpack.c.h.b16 %v525
        %v1154 = vunpack.c.l.b16 %v526
        %v1155 = vunpack.c.h.b16 %v526
        %v1156 = vunpack.c.l.b16 %v527
        %v1157 = vunpack.c.h.b16 %v527
        %v1158 = vunpack.c.l.b16 %v528
        %v1159 = vunpack.c.h.b16 %v528
        %v1160 = vunpack.c.l.b16 %v529
        %v1161 = vunpack.c.h.b16 %v529
        %v1162 = vunpack.c.l.b16 %v530
        %v1163 = vunpack.c.h.b16 %v530
        %v1164 = vunpack.c.l.b16 %v531
        %v1165 = vunpack.c.h.b16 %v531
        %v1166 = vunpack.c.l.b16 %v532
        %v1167 = vunpack.c.h.b16 %v532
        %v1168 = vunpack.c.l.b16 %v533
        %v1169 = vunpack.c.h.b16 %v533
        %v1170 = vunpack.c.l.b16 %v534
        %v1171 = vunpack.c.h.b16 %v534
        %v1172 = vunpack.c.l.b16 %v535
        %v1173 = vunpack.c.h.b16 %v535
        %v1174 = vunpack.c.l.b16 %v536
        %v1175 = vunpack.c.h.b16 %v536
        %v1176 = vunpack.c.l.b16 %v537
        %v1177 = vunpack.c.h.b16 %v537
        %v1178 = vunpack.c.l.b16 %v538
        %v1179 = vunpack.c.h.b16 %v538
        %v1180 = vunpack.c.l.b16 %v539
        %v1181 = vunpack.c.h.b16 %v539
        %v1182 = vunpack.c.l.b16 %v540
        %v1183 = vunpack.c.h.b16 %v540
        %v1184 = vunpack.c.l.b16 %v541
        %v1185 = vunpack.c.h.b16 %v541
        %v1186 = vunpack.c.l.b16 %v542
        %v1187 = vunpack.c.h.b16 %v542
        %v1188 = vunpack.c.l.b16 %v543
        %v1189 = vunpack.c.h.b16 %v543
        %v1190 = vunpack.c.l.b16 %v544
        %v1191 = vunpack.c.h.b16 %v544
        %v1192 = vunpack.c.l.b16 %v545
        %v1193 = vunpack.c.h.b16 %v545
        %v1194 = vunpack.c.l.b16 %v546
        %v1195 = vunpack.c.h.b16 %v546
        %v1196 = vunpack.c.l.b16 %v547
        %v1197 = vunpack.c.h.b16 %v547
        %v1198 = vunpack.c.l.b16 %v548
        %v1199 = vunpack.c.h.b16 %v548
        %v1200 = vunpack.c.l.b16 %v549
        %v1201 = vunpack.c.h.b16 %v549
        %v1202 = vunpack.c.l.b16 %v550
        %v1203 = vunpack.c.h.b16 %v550
        %v1204 = vunpack.c.l.b16 %v551
        %v1205 = vunpack.c.h.b16 %v551
        %v1206 = vunpack.c.l.b16 %v552
        %v1207 = vunpack.c.h.b16 %v552
        %v1208 = vunpack.c.l.b16 %v553
        %v1209 = vunpack.c.h.b16 %v553
        %v1210 = vunpack.c.l.b16 %v554
        %v1211 = vunpack.c.h.b16 %v554
        %v1212 = vunpack.c.l.b16 %v555
        %v1213 = vunpack.c.h.b16 %v555
        %v1214 = vunpack.c.l.b16 %v556
        %v1215 = vunpack.c.h.b16 %v556
        %v1216 = vunpack.c.l.b16 %v557
        %v1217 = vunpack.c.h.b16 %v557
        %v1218 = vunpack.c.l.b16 %v558
        %v1219 = vunpack.c.h.b16 %v558
        %v1220 = vunpack.c.l.b16 %v559
        %v1221 = vunpack.c.h.b16 %v559
        %v1222 = vunpack.c.l.b16 %v560
        %v1223 = vunpack.c.h.b16 %v560
        %v1224 = vunpack.c.l.b16 %v561
        %v1225 = vunpack.c.h.b16 %v561
        %v1226 = vunpack.c.l.b16 %v562
        %v1227 = vunpack.c.h.b16 %v562
        %v1228 = vunpack.c.l.b16 %v563
        %v1229 = vunpack.c.h.b16 %v563
        %v1230 = vunpack.c.l.b16 %v564
        %v1231 = vunpack.c.h.b16 %v564
        %v1232 = vunpack.c.l.b16 %v565
        %v1233 = vunpack.c.h.b16 %v565
        %v1234 = vunpack.c.l.b16 %v566
        %v1235 = vunpack.c.h.b16 %v566
        %v1236 = vunpack.c.l.b16 %v567
        %v1237 = vunpack.c.h.b16 %v567
        %v1238 = vunpack.c.l.b16 %v568
        %v1239 = vunpack.c.h.b16 %v568
        %v1240 = vunpack.c.l.b16 %v569
        %v1241 = vunpack.c.h.b16 %v569
        %v1242 = vunpack.c.l.b16 %v570
        %v1243 = vunpack.c.h.b16 %v570
        %v1244 = vunpack.c.l.b16 %v571
        %v1245 = vunpack.c.h.b16 %v571
        %v1246 = vunpack.c.l.b16 %v572
        %v1247 = vunpack.c.h.b16 %v572
        %v1248 = vunpack.c.l.b16 %v573
        %v1249 = vunpack.c.h.b16 %v573
        %v1250 = vunpack.c.l.b16 %v574
        %v1251 = vunpack.c.h.b16 %v574
        %v1252 = vunpack.c.l.b16 %v575
        %v1253 = vunpack.c.h.b16 %v575
        %v1254 = vunpack.c.l.b16 %v576
        %v1255 = vunpack.c.h.b16 %v576
        %v1256 = vunpack.c.l.b16 %v577
        %v1257 = vunpack.c.h.b16 %v577
        %v1258 = vunpack.c.l.b16 %v578
        %v1259 = vunpack.c.h.b16 %v578
        %v1260 = vunpack.c.l.b16 %v579
        %v1261 = vunpack.c.h.b16 %v579
        %v1262 = vunpack.c.l.b16 %v580
        %v1263 = vunpack.c.h.b16 %v580
        %v1264 = vunpack.c.l.b16 %v581
        %v1265 = vunpack.c.h.b16 %v581
        %v1266 = vunpack.c.l.b16 %v582
        %v1267 = vunpack.c.h.b16 %v582
        %v1268 = vunpack.c.l.b16 %v583
        %v1269 = vunpack.c.h.b16 %v583
        %v1270 = vunpack.c.l.b16 %v584
        %v1271 = vunpack.c.h.b16 %v584
        %v1272 = vunpack.c.l.b16 %v585
        %v1273 = vunpack.c.h.b16 %v585
        %v1274 = vunpack.c.l.b16 %v586
        %v1275 = vunpack.c.h.b16 %v586
        %v1276 = vunpack.c.l.b16 %v587
        %v1277 = vunpack.c.h.b16 %v587
        %v1278 = vunpack.c.l.b16 %v588
        %v1279 = vunpack.c.h.b16 %v588
        %v1280 = vunpack.c.l.b16 %v589
        %v1281 = vunpack.c.h.b16 %v589
        %v1282 = vunpack.c.l.b16 %v590
        %v1283 = vunpack.c.h.b16 %v590
        %v1284 = vunpack.c.l.b16 %v591
        %v1285 = vunpack.c.h.b16 %v591
        %v1286 = vunpack.c.l.b16 %v592
        %v1287 = vunpack.c.h.b16 %v592
        %v1288 = vunpack.c.l.b16 %v593
        %v1289 = vunpack.c.h.b16 %v593
        %v1290 = vunpack.c.l.b16 %v594
        %v1291 = vunpack.c.h.b16 %v594
        %v1292 = vunpack.c.l.b16 %v595
        %v1293 = vunpack.c.h.b16 %v595
        %v1294 = vunpack.c.l.b16 %v596
        %v1295 = vunpack.c.h.b16 %v596
        %v1296 = vunpack.c.l.b16 %v597
        %v1297 = vunpack.c.h.b16 %v597
        %v1298 = vunpack.c.l.b16 %v598
        %v1299 = vunpack.c.h.b16 %v598
        %v1300 = vunpack.c.l.b16 %v599
        %v1301 = vunpack.c.h.b16 %v599
        %v1302 = vunpack.c.l.b16 %v600
        %v1303 = vunpack.c.h.b16 %v600
        %v1304 = vunpack.c.l.b16 %v601
        %v1305 = vunpack.c.h.b16 %v601
        %v1306 = vunpack.c.l.b16 %v602
        %v1307 = vunpack.c.h.b16 %v602
        %v1308 = vunpack.c.l.b16 %v603
        %v1309 = vunpack.c.h.b16 %v603
        %v1310 = vunpack.c.l.b16 %v604
        %v1311 = vunpack.c.h.b16 %v604
        %v1312 = vunpack.c.l.b16 %v605
        %v1313 = vunpack.c.h.b16 %v605
        %v1314 = vunpack.c.l.b16 %v606
        %v1315 = vunpack.c.h.b16 %v606
        %v1316 = vunpack.c.l.b16 %v607
        %v1317 = vunpack.c.h.b16 %v607
        %v1318 = vunpack.c.l.b16 %v608
        %v1319 = vunpack.c.h.b16 %v608
        %v1320 = vunpack.c.l.b16 %v609
        %v1321 = vunpack.c.h.b16 %v609
        %v1322 = vunpack.c.l.b16 %v610
        %v1323 = vunpack.c.h.b16 %v610
        %v1324 = vunpack.c.l.b16 %v611
        %v1325 = vunpack.c.h.b16 %v611
        %v1326 = vunpack.c.l.b16 %v612
        %v1327 = vunpack.c.h.b16 %v612
        %v1328 = vunpack.c.l.b16 %v613
        %v1329 = vunpack.c.h.b16 %v613
        %v1330 = vunpack.c.l.b16 %v614
        %v1331 = vunpack.c.h.b16 %v614
        %v1332 = vunpack.c.l.b16 %v615
        %v1333 = vunpack.c.h.b16 %v615
        %v1334 = vunpack.c.l.b16 %v616
        %v1335 = vunpack.c.h.b16 %v616
        %v1336 = vunpack.c.l.b16 %v617
        %v1337 = vunpack.c.h.b16 %v617
        %v1338 = vunpack.c.l.b16 %v618
        %v1339 = vunpack.c.h.b16 %v618
        %v1340 = vunpack.c.l.b16 %v619
        %v1341 = vunpack.c.h.b16 %v619
        %v1342 = vunpack.c.l.b16 %v620
        %v1343 = vunpack.c.h.b16 %v620
        %v1344 = vunpack.c.l.b16 %v621
        %v1345 = vunpack.c.h.b16 %v621
        %v1346 = vunpack.c.l.b16 %v622
        %v1347 = vunpack.c.h.b16 %v622
        %v1348 = vunpack.c.l.b16 %v623
        %v1349 = vunpack.c.h.b16 %v623
        %v1350 = vunpack.c.l.b16 %v624
        %v1351 = vunpack.c.h.b16 %v624
        %v1352 = vunpack.c.l.b16 %v625
        %v1353 = vunpack.c.h.b16 %v625
        %v1354 = vunpack.c.l.b16 %v626
        %v1355 = vunpack.c.h.b16 %v626
        %v1356 = vunpack.c.l.b16 %v627
        %v1357 = vunpack.c.h.b16 %v627
        %v1358 = vunpack.c.l.b16 %v628
        %v1359 = vunpack.c.h.b16 %v628
        %v1360 = vunpack.c.l.b16 %v629
        %v1361 = vunpack.c.h.b16 %v629
        %v1362 = vunpack.c.l.b16 %v630
        %v1363 = vunpack.c.h.b16 %v630
        %v1364 = vunpack.c.l.b16 %v631
        %v1365 = vunpack.c.h.b16 %v631
        %v1366 = vunpack.c.l.b16 %v632
        %v1367 = vunpack.c.h.b16 %v632
        %v1368 = vunpack.c.l.b16 %v633
        %v1369 = vunpack.c.h.b16 %v633
        %v1370 = vunpack.c.l.b16 %v634
        %v1371 = vunpack.c.h.b16 %v634
        %v1372 = vunpack.c.l.b16 %v635
        %v1373 = vunpack.c.h.b16 %v635
        %v1374 = vunpack.c.l.b16 %v636
        %v1375 = vunpack.c.h.b16 %v636
        %v1376 = vunpack.c.l.b16 %v637
        %v1377 = vunpack.c.h.b16 %v637
        %v1378 = vunpack.c.l.b16 %v638
        %v1379 = vunpack.c.h.b16 %v638
        %v1380 = vunpack.c.l.b16 %v639
        %v1381 = vunpack.c.h.b16 %v639
        %v1382 = vunpack.c.l.b16 %v640
        %v1383 = vunpack.c.h.b16 %v640
        %v1384 = vunpack.c.l.b16 %v641
        %v1385 = vunpack.c.h.b16 %v641
        %v1386 = vunpack.c.l.b16 %v642
        %v1387 = vunpack.c.h.b16 %v642
        %v1388 = vunpack.c.l.b16 %v643
        %v1389 = vunpack.c.h.b16 %v643
        %v1390 = vunpack.c.l.b16 %v644
        %v1391 = vunpack.c.h.b16 %v644
        %v1392 = vunpack.c.l.b16 %v645
        %v1393 = vunpack.c.h.b16 %v645
        %v1394 = vunpack.c.l.b16 %v646
        %v1395 = vunpack.c.h.b16 %v646
        %v1396 = vunpack.c.l.b16 %v647
        %v1397 = vunpack.c.h.b16 %v647
        %v1398 = vunpack.c.l.b16 %v648
        %v1399 = vunpack.c.h.b16 %v648
        %v1400 = vunpack.c.l.b16 %v649
        %v1401 = vunpack.c.h.b16 %v649
        %v1402 = vunpack.c.l.b16 %v650
        %v1403 = vunpack.c.h.b16 %v650
        %v1404 = vunpack.c.l.b16 %v651
        %v1405 = vunpack.c.h.b16 %v651
        %v1406 = vunpack.c.l.b16 %v652
        %v1407 = vunpack.c.h.b16 %v652
        %v1408 = vunpack.c.l.b16 %v653
        %v1409 = vunpack.c.h.b16 %v653
        %v1410 = vunpack.c.l.b16 %v654
        %v1411 = vunpack.c.h.b16 %v654
        %v1412 = vunpack.c.l.b16 %v655
        %v1413 = vunpack.c.h.b16 %v655
        %v1414 = vunpack.c.l.b16 %v656
        %v1415 = vunpack.c.h.b16 %v656
        %v1416 = vunpack.c.l.b16 %v657
        %v1417 = vunpack.c.h.b16 %v657
        %v1418 = vunpack.c.l.b16 %v658
        %v1419 = vunpack.c.h.b16 %v658
        %v1420 = vunpack.c.l.b16 %v659
        %v1421 = vunpack.c.h.b16 %v659
        %v1422 = vunpack.c.l.b16 %v660
        %v1423 = vunpack.c.h.b16 %v660
        %v1424 = vunpack.c.l.b16 %v661
        %v1425 = vunpack.c.h.b16 %v661
        %v1426 = vunpack.c.l.b16 %v662
        %v1427 = vunpack.c.h.b16 %v662
        %v1428 = vunpack.c.l.b16 %v663
        %v1429 = vunpack.c.h.b16 %v663
        %v1430 = vunpack.c.l.b16 %v664
        %v1431 = vunpack.c.h.b16 %v664
        %v1432 = vunpack.c.l.b16 %v665
        %v1433 = vunpack.c.h.b16 %v665
        %v1434 = vunpack.c.l.b16 %v666
        %v1435 = vunpack.c.h.b16 %v666
        %v1436 = vunpack.c.l.b16 %v667
        %v1437 = vunpack.c.h.b16 %v667
        %v1438 = vunpack.c.l.b16 %v668
        %v1439 = vunpack.c.h.b16 %v668
        %v1440 = vunpack.c.l.b16 %v669
        %v1441 = vunpack.c.h.b16 %v669
        %v1442 = vunpack.c.l.b16 %v670
        %v1443 = vunpack.c.h.b16 %v670
        %v1444 = vunpack.c.l.b16 %v671
        %v1445 = vunpack.c.h.b16 %v671
        %v1446 = vunpack.c.l.b16 %v672
        %v1447 = vunpack.c.h.b16 %v672
        %v1448 = vunpack.c.l.b16 %v673
        %v1449 = vunpack.c.h.b16 %v673
        %v1450 = vunpack.c.l.b16 %v674
        %v1451 = vunpack.c.h.b16 %v674
        %v1452 = vunpack.c.l.b16 %v675
        %v1453 = vunpack.c.h.b16 %v675
        %v1454 = vunpack.c.l.b16 %v676
        %v1455 = vunpack.c.h.b16 %v676
        %v1456 = vunpack.c.l.b16 %v677
        %v1457 = vunpack.c.h.b16 %v677
        %v1458 = vunpack.c.l.b16 %v678
        %v1459 = vunpack.c.h.b16 %v678
        %v1460 = vunpack.c.l.b16 %v679
        %v1461 = vunpack.c.h.b16 %v679
        %v1462 = vunpack.c.l.b16 %v680
        %v1463 = vunpack.c.h.b16 %v680
        %v1464 = vunpack.c.l.b16 %v681
        %v1465 = vunpack.c.h.b16 %v681
        %v1466 = vunpack.c.l.b16 %v682
        %v1467 = vunpack.c.h.b16 %v682
        %v1468 = vunpack.c.l.b16 %v683
        %v1469 = vunpack.c.h.b16 %v683
        %v1470 = vunpack.c.l.b16 %v684
        %v1471 = vunpack.c.h.b16 %v684
        %v1472 = vunpack.c.l.b16 %v685
        %v1473 = vunpack.c.h.b16 %v685
        %v1474 = vunpack.c.l.b16 %v686
        %v1475 = vunpack.c.h.b16 %v686
        %v1476 = vunpack.c.l.b16 %v687
        %v1477 = vunpack.c.h.b16 %v687
        %v1478 = vunpack.c.l.b16 %v688
        %v1479 = vunpack.c.h.b16 %v688
        %v1480 = vunpack.c.l.b16 %v689
        %v1481 = vunpack.c.h.b16 %v689
        %v1482 = vunpack.c.l.b16 %v690
        %v1483 = vunpack.c.h.b16 %v690
        %v1484 = vunpack.c.l.b16 %v691
        %v1485 = vunpack.c.h.b16 %v691
        %v1486 = vunpack.c.l.b16 %v692
        %v1487 = vunpack.c.h.b16 %v692
        %v1488 = vunpack.c.l.b16 %v693
        %v1489 = vunpack.c.h.b16 %v693
        %v1490 = vunpack.c.l.b16 %v694
        %v1491 = vunpack.c.h.b16 %v694
        %v1492 = vunpack.c.l.b16 %v695
        %v1493 = vunpack.c.h.b16 %v695
        %v1494 = vunpack.c.l.b16 %v696
        %v1495 = vunpack.c.h.b16 %v696
        %v1496 = vunpack.c.l.b16 %v697
        %v1497 = vunpack.c.h.b16 %v697
        %v1498 = vunpack.c.l.b16 %v698
        %v1499 = vunpack.c.h.b16 %v698
        %v1500 = vunpack.c.l.b16 %v699
        %v1501 = vunpack.c.h.b16 %v699
        %v1502 = vunpack.c.l.b16 %v700
        %v1503 = vunpack.c.h.b16 %v700
        %v1504 = vunpack.c.l.b16 %v701
        %v1505 = vunpack.c.h.b16 %v701
        %v1506 = vunpack.c.l.b16 %v702
        %v1507 = vunpack.c.h.b16 %v702
        %v1508 = vunpack.c.l.b16 %v703
        %v1509 = vunpack.c.h.b16 %v703
        %v1510 = vunpack.c.l.b16 %v704
        %v1511 = vunpack.c.h.b16 %v704
        %v1512 = vunpack.c.l.b16 %v705
        %v1513 = vunpack.c.h.b16 %v705
        %v1514 = vunpack.c.l.b16 %v706
        %v1515 = vunpack.c.h.b16 %v706
        %v1516 = vunpack.c.l.b16 %v707
        %v1517 = vunpack.c.h.b16 %v707
        %v1518 = vunpack.c.l.b16 %v708
        %v1519 = vunpack.c.h.b16 %v708
        %v1520 = vunpack.c.l.b16 %v709
        %v1521 = vunpack.c.h.b16 %v709
        %v1522 = vunpack.c.l.b16 %v710
        %v1523 = vunpack.c.h.b16 %v710
        %v1524 = vunpack.c.l.b16 %v711
        %v1525 = vunpack.c.h.b16 %v711
        %v1526 = vunpack.c.l.b16 %v712
        %v1527 = vunpack.c.h.b16 %v712
        %v1528 = vunpack.c.l.b16 %v713
        %v1529 = vunpack.c.h.b16 %v713
        %v1530 = vunpack.c.l.b16 %v714
        %v1531 = vunpack.c.h.b16 %v714
        %v1532 = vunpack.c.l.b16 %v715
        %v1533 = vunpack.c.h.b16 %v715
        %v1534 = vunpack.c.l.b16 %v716
        %v1535 = vunpack.c.h.b16 %v716
        %v1536 = vunpack.c.l.b16 %v717
        %v1537 = vunpack.c.h.b16 %v717
        %v1538 = vunpack.c.l.b16 %v718
        %v1539 = vunpack.c.h.b16 %v718
        %v1540 = vunpack.c.l.b16 %v719
        %v1541 = vunpack.c.h.b16 %v719
        %v1542 = vunpack.c.l.b16 %v720
        %v1543 = vunpack.c.h.b16 %v720
        %v1544 = vunpack.c.l.b16 %v721
        %v1545 = vunpack.c.h.b16 %v721
        %v1546 = vunpack.c.l.b16 %v722
        %v1547 = vunpack.c.h.b16 %v722
        %v1548 = vunpack.c.l.b16 %v723
        %v1549 = vunpack.c.h.b16 %v723
        %v1550 = vunpack.c.l.b16 %v724
        %v1551 = vunpack.c.h.b16 %v724
        %v1552 = vunpack.c.l.b16 %v725
        %v1553 = vunpack.c.h.b16 %v725
        %v1554 = vunpack.c.l.b16 %v726
        %v1555 = vunpack.c.h.b16 %v726
        %v1556 = vunpack.c.l.b16 %v727
        %v1557 = vunpack.c.h.b16 %v727
        %v1558 = vpack.c.b16 %v1048, %v1046
        %v1559 = vpack.c.b16 %v1049, %v1047
        %v1560 = vpack.c.b16 %v1052, %v1050
        %v1561 = vpack.c.b16 %v1053, %v1051
        %v1562 = vpack.c.b16 %v1056, %v1054
        %v1563 = vpack.c.b16 %v1057, %v1055
        %v1564 = vpack.c.b16 %v1060, %v1058
        %v1565 = vpack.c.b16 %v1061, %v1059
        %v1566 = vpack.c.b16 %v1064, %v1062
        %v1567 = vpack.c.b16 %v1065, %v1063
        %v1568 = vpack.c.b16 %v1068, %v1066
        %v1569 = vpack.c.b16 %v1069, %v1067
        %v1570 = vpack.c.b16 %v1072, %v1070
        %v1571 = vpack.c.b16 %v1073, %v1071
        %v1572 = vpack.c.b16 %v1076, %v1074
        %v1573 = vpack.c.b16 %v1077, %v1075
        %v1574 = vpack.c.b16 %v1080, %v1078
        %v1575 = vpack.c.b16 %v1081, %v1079
        %v1576 = vpack.c.b16 %v1084, %v1082
        %v1577 = vpack.c.b16 %v1085, %v1083
        %v1578 = vpack.c.b16 %v1088, %v1086
        %v1579 = vpack.c.b16 %v1089, %v1087
        %v1580 = vpack.c.b16 %v1092, %v1090
        %v1581 = vpack.c.b16 %v1093, %v1091
        %v1582 = vpack.c.b16 %v1096, %v1094
        %v1583 = vpack.c.b16 %v1097, %v1095
        %v1584 = vpack.c.b16 %v1100, %v1098
        %v1585 = vpack.c.b16 %v1101, %v1099
        %v1586 = vpack.c.b16 %v1104, %v1102
        %v1587 = vpack.c.b16 %v1105, %v1103
        %v1588 = vpack.c.b16 %v1108, %v1106
        %v1589 = vpack.c.b16 %v1109, %v1107
        %v1590 = vpack.c.b16 %v1112, %v1110
        %v1591 = vpack.c.b16 %v1113, %v1111
        %v1592 = vpack.c.b16 %v1116, %v1114
        %v1593 = vpack.c.b16 %v1117, %v1115
        %v1594 = vpack.c.b16 %v1120, %v1118
        %v1595 = vpack.c.b16 %v1121, %v1119
        %v1596 = vpack.c.b16 %v1124, %v1122
        %v1597 = vpack.c.b16 %v1125, %v1123
        %v1598 = vpack.c.b16 %v1128, %v1126
        %v1599 = vpack.c.b16 %v1129, %v1127
        %v1600 = vpack.c.b16 %v1132, %v1130
        %v1601 = vpack.c.b16 %v1133, %v1131
        %v1602 = vpack.c.b16 %v1136, %v1134
        %v1603 = vpack.c.b16 %v1137, %v1135
        %v1604 = vpack.c.b16 %v1140, %v1138
        %v1605 = vpack.c.b16 %v1141, %v1139
        %v1606 = vpack.c.b16 %v1144, %v1142
        %v1607 = vpack.c.b16 %v1145, %v1143
        %v1608 = vpack.c.b16 %v1148, %v1146
        %v1609 = vpack.c.b16 %v1149, %v1147
        %v1610 = vpack.c.b16 %v1152, %v1150
        %v1611 = vpack.c.b16 %v1153, %v1151
        %v1612 = vpack.c.b16 %v1156, %v1154
        %v1613 = vpack.c.b16 %v1157, %v1155
        %v1614 = vpack.c.b16 %v1160, %v1158
        %v1615 = vpack.c.b16 %v1161, %v1159
        %v1616 = vpack.c.b16 %v1164, %v1162
        %v1617 = vpack.c.b16 %v1165, %v1163
        %v1618 = vpack.c.b16 %v1168, %v1166
        %v1619 = vpack.c.b16 %v1169, %v1167
        %v1620 = vpack.c.b16 %v1172, %v1170
        %v1621 = vpack.c.b16 %v1173, %v1171
        %v1622 = vpack.c.b16 %v1176, %v1174
        %v1623 = vpack.c.b16 %v1177, %v1175
        %v1624 = vpack.c.b16 %v1180, %v1178
        %v1625 = vpack.c.b16 %v1181, %v1179
        %v1626 = vpack.c.b16 %v1184, %v1182
        %v1627 = vpack.c.b16 %v1185, %v1183
        %v1628 = vpack.c.b16 %v1188, %v1186
        %v1629 = vpack.c.b16 %v1189, %v1187
        %v1630 = vpack.c.b16 %v1192, %v1190
        %v1631 = vpack.c.b16 %v1193, %v1191
        %v1632 = vpack.c.b16 %v1196, %v1194
        %v1633 = vpack.c.b16 %v1197, %v1195
        %v1634 = vpack.c.b16 %v1200, %v1198
        %v1635 = vpack.c.b16 %v1201, %v1199
        %v1636 = vpack.c.b16 %v1204, %v1202
        %v1637 = vpack.c.b16 %v1205, %v1203
        %v1638 = vpack.c.b16 %v1208, %v1206
        %v1639 = vpack.c.b16 %v1209, %v1207
        %v1640 = vpack.c.b16 %v1212, %v1210
        %v1641 = vpack.c.b16 %v1213, %v1211
        %v1642 = vpack.c.b16 %v1216, %v1214
        %v1643 = vpack.c.b16 %v1217, %v1215
        %v1644 = vpack.c.b16 %v1220, %v1218
        %v1645 = vpack.c.b16 %v1221, %v1219
        %v1646 = vpack.c.b16 %v1224, %v1222
        %v1647 = vpack.c.b16 %v1225, %v1223
        %v1648 = vpack.c.b16 %v1228, %v1226
        %v1649 = vpack.c.b16 %v1229, %v1227
        %v1650 = vpack.c.b16 %v1232, %v1230
        %v1651 = vpack.c.b16 %v1233, %v1231
        %v1652 = vpack.c.b16 %v1236, %v1234
        %v1653 = vpack.c.b16 %v1237, %v1235
        %v1654 = vpack.c.b16 %v1240, %v1238
        %v1655 = vpack.c.b16 %v1241, %v1239
        %v1656 = vpack.c.b16 %v1244, %v1242
        %v1657 = vpack.c.b16 %v1245, %v1243
        %v1658 = vpack.c.b16 %v1248, %v1246
        %v1659 = vpack.c.b16 %v1249, %v1247
        %v1660 = vpack.c.b16 %v1252, %v1250
        %v1661 = vpack.c.b16 %v1253, %v1251
        %v1662 = vpack.c.b16 %v1256, %v1254
        %v1663 = vpack.c.b16 %v1257, %v1255
        %v1664 = vpack.c.b16 %v1260, %v1258
        %v1665 = vpack.c.b16 %v1261, %v1259
        %v1666 = vpack.c.b16 %v1264, %v1262
        %v1667 = vpack.c.b16 %v1265, %v1263
        %v1668 = vpack.c.b16 %v1268, %v1266
        %v1669 = vpack.c.b16 %v1269, %v1267
        %v1670 = vpack.c.b16 %v1272, %v1270
        %v1671 = vpack.c.b16 %v1273, %v1271
        %v1672 = vpack.c.b16 %v1276, %v1274
        %v1673 = vpack.c.b16 %v1277, %v1275
        %v1674 = vpack.c.b16 %v1280, %v1278
        %v1675 = vpack.c.b16 %v1281, %v1279
        %v1676 = vpack.c.b16 %v1284, %v1282
        %v1677 = vpack.c.b16 %v1285, %v1283
        %v1678 = vpack.c.b16 %v1288, %v1286
        %v1679 = vpack.c.b16 %v1289, %v1287
        %v1680 = vpack.c.b16 %v1292, %v1290
        %v1681 = vpack.c.b16 %v1293, %v1291
        %v1682 = vpack.c.b16 %v1296, %v1294
        %v1683 = vpack.c.b16 %v1297, %v1295
        %v1684 = vpack.c.b16 %v1300, %v1298
        %v1685 = vpack.c.b16 %v1301, %v1299
        %v1686 = vpack.c.b16 %v1304, %v1302
        %v1687 = vpack.c.b16 %v1305, %v1303
        %v1688 = vpack.c.b16 %v1308, %v1306
        %v1689 = vpack.c.b16 %v1309, %v1307
        %v1690 = vpack.c.b16 %v1312, %v1310
        %v1691 = vpack.c.b16 %v1313, %v1311
        %v1692 = vpack.c.b16 %v1316, %v1314
        %v1693 = vpack.c.b16 %v1317, %v1315
        %v1694 = vpack.c.b16 %v1320, %v1318
        %v1695 = vpack.c.b16 %v1321, %v1319
        %v1696 = vpack.c.b16 %v1324, %v1322
        %v1697 = vpack.c.b16 %v1325, %v1323
        %v1698 = vpack.c.b16 %v1328, %v1326
        %v1699 = vpack.c.b16 %v1329, %v1327
        %v1700 = vpack.c.b16 %v1332, %v1330
        %v1701 = vpack.c.b16 %v1333, %v1331
        %v1702 = vpack.c.b16 %v1336, %v1334
        %v1703 = vpack.c.b16 %v1337, %v1335
        %v1704 = vpack.c.b16 %v1340, %v1338
        %v1705 = vpack.c.b16 %v1341, %v1339
        %v1706 = vpack.c.b16 %v1344, %v1342
        %v1707 = vpack.c.b16 %v1345, %v1343
        %v1708 = vpack.c.b16 %v1348, %v1346
        %v1709 = vpack.c.b16 %v1349, %v1347
        %v1710 = vpack.c.b16 %v1352, %v1350
        %v1711 = vpack.c.b16 %v1353, %v1351
        %v1712 = vpack.c.b16 %v1356, %v1354
        %v1713 = vpack.c.b16 %v1357, %v1355
        %v1714 = vpack.c.b16 %v1360, %v1358
        %v1715 = vpack.c.b16 %v1361, %v1359
        %v1716 = vpack.c.b16 %v1364, %v1362
        %v1717 = vpack.c.b16 %v1365, %v1363
        %v1718 = vpack.c.b16 %v1368, %v1366
        %v1719 = vpack.c.b16 %v1369, %v1367
        %v1720 = vpack.c.b16 %v1372, %v1370
        %v1721 = vpack.c.b16 %v1373, %v1371
        %v1722 = vpack.c.b16 %v1376, %v1374
        %v1723 = vpack.c.b16 %v1377, %v1375
        %v1724 = vpack.c.b16 %v1380, %v1378
        %v1725 = vpack.c.b16 %v1381, %v1379
        %v1726 = vpack.c.b16 %v1384, %v1382
        %v1727 = vpack.c.b16 %v1385, %v1383
        %v1728 = vpack.c.b16 %v1388, %v1386
        %v1729 = vpack.c.b16 %v1389, %v1387
        %v1730 = vpack.c.b16 %v1392, %v1390
        %v1731 = vpack.c.b16 %v1393, %v1391
        %v1732 = vpack.c.b16 %v1396, %v1394
        %v1733 = vpack.c.b16 %v1397, %v1395
        %v1734 = vpack.c.b16 %v1400, %v1398
        %v1735 = vpack.c.b16 %v1401, %v1399
        %v1736 = vpack.c.b16 %v1404, %v1402
        %v1737 = vpack.c.b16 %v1405, %v1403
        %v1738 = vpack.c.b16 %v1408, %v1406
        %v1739 = vpack.c.b16 %v1409, %v1407
        %v1740 = vpack.c.b16 %v1412, %v1410
        %v1741 = vpack.c.b16 %v1413, %v1411
        %v1742 = vpack.c.b16 %v1416, %v1414
        %v1743 = vpack.c.b16 %v1417, %v1415
        %v1744 = vpack.c.b16 %v1420, %v1418
        %v1745 = vpack.c.b16 %v1421, %v1419
        %v1746 = vpack.c.b16 %v1424, %v1422
        %v1747 = vpack.c.b16 %v1425, %v1423
        %v1748 = vpack.c.b16 %v1428, %v1426
        %v1749 = vpack.c.b16 %v1429, %v1427
        %v1750 = vpack.c.b16 %v1432, %v1430
        %v1751 = vpack.c.b16 %v1433, %v1431
        %v1752 = vpack.c.b16 %v1436, %v1434
        %v1753 = vpack.c.b16 %v1437, %v1435
        %v1754 = vpack.c.b16 %v1440, %v1438
        %v1755 = vpack.c.b16 %v1441, %v1439
        %v1756 = vpack.c.b16 %v1444, %v1442
        %v1757 = vpack.c.b16 %v1445, %v1443
        %v1758 = vpack.c.b16 %v1448, %v1446
        %v1759 = vpack.c.b16 %v1449, %v1447
        %v1760 = vpack.c.b16 %v1452, %v1450
        %v1761 = vpack.c.b16 %v1453, %v1451
        %v1762 = vpack.c.b16 %v1456, %v1454
        %v1763 = vpack.c.b16 %v1457, %v1455
        %v1764 = vpack.c.b16 %v1460, %v1458
        %v1765 = vpack.c.b16 %v1461, %v1459
        %v1766 = vpack.c.b16 %v1464, %v1462
        %v1767 = vpack.c.b16 %v1465, %v1463
        %v1768 = vpack.c.b16 %v1468, %v1466
        %v1769 = vpack.c.b16 %v1469, %v1467
        %v1770 = vpack.c.b16 %v1472, %v1470
        %v1771 = vpack.c.b16 %v1473, %v1471
        %v1772 = vpack.c.b16 %v1476, %v1474
        %v1773 = vpack.c.b16 %v1477, %v1475
        %v1774 = vpack.c.b16 %v1480, %v1478
        %v1775 = vpack.c.b16 %v1481, %v1479
        %v1776 = vpack.c.b16 %v1484, %v1482
        %v1777 = vpack.c.b16 %v1485, %v1483
        %v1778 = vpack.c.b16 %v1488, %v1486
        %v1779 = vpack.c.b16 %v1489, %v1487
        %v1780 = vpack.c.b16 %v1492, %v1490
        %v1781 = vpack.c.b16 %v1493, %v1491
        %v1782 = vpack.c.b16 %v1496, %v1494
        %v1783 = vpack.c.b16 %v1497, %v1495
        %v1784 = vpack.c.b16 %v1500, %v1498
        %v1785 = vpack.c.b16 %v1501, %v1499
        %v1786 = vpack.c.b16 %v1504, %v1502
        %v1787 = vpack.c.b16 %v1505, %v1503
        %v1788 = vpack.c.b16 %v1508, %v1506
        %v1789 = vpack.c.b16 %v1509, %v1507
        %v1790 = vpack.c.b16 %v1512, %v1510
        %v1791 = vpack.c.b16 %v1513, %v1511
        %v1792 = vpack.c.b16 %v1516, %v1514
        %v1793 = vpack.c.b16 %v1517, %v1515
        %v1794 = vpack.c.b16 %v1520, %v1518
        %v1795 = vpack.c.b16 %v1521, %v1519
        %v1796 = vpack.c.b16 %v1524, %v1522
        %v1797 = vpack.c.b16 %v1525, %v1523
        %v1798 = vpack.c.b16 %v1528, %v1526
        %v1799 = vpack.c.b16 %v1529, %v1527
        %v1800 = vpack.c.b16 %v1532, %v1530
        %v1801 = vpack.c.b16 %v1533, %v1531
        %v1802 = vpack.c.b16 %v1536, %v1534
        %v1803 = vpack.c.b16 %v1537, %v1535
        %v1804 = vpack.c.b16 %v1540, %v1538
        %v1805 = vpack.c.b16 %v1541, %v1539
        %v1806 = vpack.c.b16 %v1544, %v1542
        %v1807 = vpack.c.b16 %v1545, %v1543
        %v1808 = vpack.c.b16 %v1548, %v1546
        %v1809 = vpack.c.b16 %v1549, %v1547
        %v1810 = vpack.c.b16 %v1552, %v1550
        %v1811 = vpack.c.b16 %v1553, %v1551
        %v1812 = vpack.c.b16 %v1556, %v1554
        %v1813 = vpack.c.b16 %v1557, %v1555
        %2070 = vmatpush.bf16.msra.mxu0 %v1572
        %2071 = vmatpush.bf16.msra.mxu0 %v1570
        %2072 = vmatpush.bf16.msra.mxu0 %v1568
        %2073 = vmatpush.bf16.msra.mxu0 %v1566
        %2074 = vmatpush.bf16.msra.mxu0 %v1564
        %2075 = vmatpush.bf16.msra.mxu0 %v1562
        %2076 = vmatpush.bf16.msra.mxu0 %v1560
        %2077 = vmatpush.bf16.msra.mxu0 %v1558
        %2078 = vmatmul.bf16.gmra.mxu0 %v758
        %v2079 = vpop.f32.mrf.mxu0
        %v2080 = vadd.f32 %v730, %v2079
        %v2081 = vpop.f32.mrf.mxu0
        %2082 = vdwg.mxu0
        %2083 = vmatpush.bf16.msra.mxu0 %v1588
        %2084 = vmatpush.bf16.msra.mxu0 %v1586
        %2085 = vmatpush.bf16.msra.mxu0 %v1584
        %2086 = vmatpush.bf16.msra.mxu0 %v1582
        %2087 = vmatpush.bf16.msra.mxu0 %v1580
        %2088 = vmatpush.bf16.msra.mxu0 %v1578
        %2089 = vmatpush.bf16.msra.mxu0 %v1576
        %2090 = vmatpush.bf16.msra.mxu0 %v1574
        %2091 = vmatmul.bf16.gmra.mxu0 %v759
        %v2092 = vpop.f32.mrf.mxu0
        %v2093 = vadd.f32 %v2080, %v2092
        %v2094 = vpop.f32.mrf.mxu0
        %2095 = vdwg.mxu0
        %2096 = vmatpush.bf16.msra.mxu0 %v1604
        %2097 = vmatpush.bf16.msra.mxu0 %v1602
        %2098 = vmatpush.bf16.msra.mxu0 %v1600
        %2099 = vmatpush.bf16.msra.mxu0 %v1598
        %2100 = vmatpush.bf16.msra.mxu0 %v1596
        %2101 = vmatpush.bf16.msra.mxu0 %v1594
        %2102 = vmatpush.bf16.msra.mxu0 %v1592
        %2103 = vmatpush.bf16.msra.mxu0 %v1590
        %2104 = vmatmul.bf16.gmra.mxu0 %v760
        %v2105 = vpop.f32.mrf.mxu0
        %v2106 = vadd.f32 %v2093, %v2105
        %v2107 = vpop.f32.mrf.mxu0
        %2108 = vdwg.mxu0
        %2109 = vmatpush.bf16.msra.mxu0 %v1620
        %2110 = vmatpush.bf16.msra.mxu0 %v1618
        %2111 = vmatpush.bf16.msra.mxu0 %v1616
        %2112 = vmatpush.bf16.msra.mxu0 %v1614
        %2113 = vmatpush.bf16.msra.mxu0 %v1612
        %2114 = vmatpush.bf16.msra.mxu0 %v1610
        %2115 = vmatpush.bf16.msra.mxu0 %v1608
        %2116 = vmatpush.bf16.msra.mxu0 %v1606
        %2117 = vmatmul.bf16.gmra.mxu0 %v761
        %v2118 = vpop.f32.mrf.mxu0
        %v2119 = vadd.f32 %v2106, %v2118
        %v2120 = vpop.f32.mrf.mxu0
        %2121 = vdwg.mxu0
        %2122 = vmatpush.bf16.msra.mxu0 %v1636
        %2123 = vmatpush.bf16.msra.mxu0 %v1634
        %2124 = vmatpush.bf16.msra.mxu0 %v1632
        %2125 = vmatpush.bf16.msra.mxu0 %v1630
        %2126 = vmatpush.bf16.msra.mxu0 %v1628
        %2127 = vmatpush.bf16.msra.mxu0 %v1626
        %2128 = vmatpush.bf16.msra.mxu0 %v1624
        %2129 = vmatpush.bf16.msra.mxu0 %v1622
        %2130 = vmatmul.bf16.gmra.mxu0 %v762
        %v2131 = vpop.f32.mrf.mxu0
        %v2132 = vadd.f32 %v2119, %v2131
        %v2133 = vpop.f32.mrf.mxu0
        %2134 = vdwg.mxu0
        %2135 = vmatpush.bf16.msra.mxu0 %v1652
        %2136 = vmatpush.bf16.msra.mxu0 %v1650
        %2137 = vmatpush.bf16.msra.mxu0 %v1648
        %2138 = vmatpush.bf16.msra.mxu0 %v1646
        %2139 = vmatpush.bf16.msra.mxu0 %v1644
        %2140 = vmatpush.bf16.msra.mxu0 %v1642
        %2141 = vmatpush.bf16.msra.mxu0 %v1640
        %2142 = vmatpush.bf16.msra.mxu0 %v1638
        %2143 = vmatmul.bf16.gmra.mxu0 %v763
        %v2144 = vpop.f32.mrf.mxu0
        %v2145 = vadd.f32 %v2132, %v2144
        %v2146 = vpop.f32.mrf.mxu0
        %2147 = vdwg.mxu0
        %2148 = vmatpush.bf16.msra.mxu0 %v1668
        %2149 = vmatpush.bf16.msra.mxu0 %v1666
        %2150 = vmatpush.bf16.msra.mxu0 %v1664
        %2151 = vmatpush.bf16.msra.mxu0 %v1662
        %2152 = vmatpush.bf16.msra.mxu0 %v1660
        %2153 = vmatpush.bf16.msra.mxu0 %v1658
        %2154 = vmatpush.bf16.msra.mxu0 %v1656
        %2155 = vmatpush.bf16.msra.mxu0 %v1654
        %2156 = vmatmul.bf16.gmra.mxu0 %v764
        %v2157 = vpop.f32.mrf.mxu0
        %v2158 = vadd.f32 %v2145, %v2157
        %v2159 = vpop.f32.mrf.mxu0
        %2160 = vdwg.mxu0
        %2161 = vmatpush.bf16.msra.mxu0 %v1684
        %2162 = vmatpush.bf16.msra.mxu0 %v1682
        %2163 = vmatpush.bf16.msra.mxu0 %v1680
        %2164 = vmatpush.bf16.msra.mxu0 %v1678
        %2165 = vmatpush.bf16.msra.mxu0 %v1676
        %2166 = vmatpush.bf16.msra.mxu0 %v1674
        %2167 = vmatpush.bf16.msra.mxu0 %v1672
        %2168 = vmatpush.bf16.msra.mxu0 %v1670
        %2169 = vmatmul.bf16.gmra.mxu0 %v765
        %v2170 = vpop.f32.mrf.mxu0
        %v2171 = vadd.f32 %v2158, %v2170
        %v2172 = vpop.f32.mrf.mxu0
        %2173 = vdwg.mxu0
        %2174 = vmatpush.bf16.msra.mxu0 %v1700
        %2175 = vmatpush.bf16.msra.mxu0 %v1698
        %2176 = vmatpush.bf16.msra.mxu0 %v1696
        %2177 = vmatpush.bf16.msra.mxu0 %v1694
        %2178 = vmatpush.bf16.msra.mxu0 %v1692
        %2179 = vmatpush.bf16.msra.mxu0 %v1690
        %2180 = vmatpush.bf16.msra.mxu0 %v1688
        %2181 = vmatpush.bf16.msra.mxu0 %v1686
        %2182 = vmatmul.bf16.gmra.mxu0 %v766
        %v2183 = vpop.f32.mrf.mxu0
        %v2184 = vadd.f32 %v2171, %v2183
        %v2185 = vpop.f32.mrf.mxu0
        %2186 = vdwg.mxu0
        %2187 = vmatpush.bf16.msra.mxu0 %v1716
        %2188 = vmatpush.bf16.msra.mxu0 %v1714
        %2189 = vmatpush.bf16.msra.mxu0 %v1712
        %2190 = vmatpush.bf16.msra.mxu0 %v1710
        %2191 = vmatpush.bf16.msra.mxu0 %v1708
        %2192 = vmatpush.bf16.msra.mxu0 %v1706
        %2193 = vmatpush.bf16.msra.mxu0 %v1704
        %2194 = vmatpush.bf16.msra.mxu0 %v1702
        %2195 = vmatmul.bf16.gmra.mxu0 %v767
        %v2196 = vpop.f32.mrf.mxu0
        %v2197 = vadd.f32 %v2184, %v2196
        %v2198 = vpop.f32.mrf.mxu0
        %2199 = vdwg.mxu0
        %2200 = vmatpush.bf16.msra.mxu0 %v1732
        %2201 = vmatpush.bf16.msra.mxu0 %v1730
        %2202 = vmatpush.bf16.msra.mxu0 %v1728
        %2203 = vmatpush.bf16.msra.mxu0 %v1726
        %2204 = vmatpush.bf16.msra.mxu0 %v1724
        %2205 = vmatpush.bf16.msra.mxu0 %v1722
        %2206 = vmatpush.bf16.msra.mxu0 %v1720
        %2207 = vmatpush.bf16.msra.mxu0 %v1718
        %2208 = vmatmul.bf16.gmra.mxu0 %v768
        %v2209 = vpop.f32.mrf.mxu0
        %v2210 = vadd.f32 %v2197, %v2209
        %v2211 = vpop.f32.mrf.mxu0
        %2212 = vdwg.mxu0
        %2213 = vmatpush.bf16.msra.mxu0 %v1748
        %2214 = vmatpush.bf16.msra.mxu0 %v1746
        %2215 = vmatpush.bf16.msra.mxu0 %v1744
        %2216 = vmatpush.bf16.msra.mxu0 %v1742
        %2217 = vmatpush.bf16.msra.mxu0 %v1740
        %2218 = vmatpush.bf16.msra.mxu0 %v1738
        %2219 = vmatpush.bf16.msra.mxu0 %v1736
        %2220 = vmatpush.bf16.msra.mxu0 %v1734
        %2221 = vmatmul.bf16.gmra.mxu0 %v769
        %v2222 = vpop.f32.mrf.mxu0
        %v2223 = vadd.f32 %v2210, %v2222
        %v2224 = vpop.f32.mrf.mxu0
        %2225 = vdwg.mxu0
        %2226 = vmatpush.bf16.msra.mxu0 %v1764
        %2227 = vmatpush.bf16.msra.mxu0 %v1762
        %2228 = vmatpush.bf16.msra.mxu0 %v1760
        %2229 = vmatpush.bf16.msra.mxu0 %v1758
        %2230 = vmatpush.bf16.msra.mxu0 %v1756
        %2231 = vmatpush.bf16.msra.mxu0 %v1754
        %2232 = vmatpush.bf16.msra.mxu0 %v1752
        %2233 = vmatpush.bf16.msra.mxu0 %v1750
        %2234 = vmatmul.bf16.gmra.mxu0 %v770
        %v2235 = vpop.f32.mrf.mxu0
        %v2236 = vadd.f32 %v2223, %v2235
        %v2237 = vpop.f32.mrf.mxu0
        %2238 = vdwg.mxu0
        %2239 = vmatpush.bf16.msra.mxu0 %v1780
        %2240 = vmatpush.bf16.msra.mxu0 %v1778
        %2241 = vmatpush.bf16.msra.mxu0 %v1776
        %2242 = vmatpush.bf16.msra.mxu0 %v1774
        %2243 = vmatpush.bf16.msra.mxu0 %v1772
        %2244 = vmatpush.bf16.msra.mxu0 %v1770
        %2245 = vmatpush.bf16.msra.mxu0 %v1768
        %2246 = vmatpush.bf16.msra.mxu0 %v1766
        %2247 = vmatmul.bf16.gmra.mxu0 %v771
        %v2248 = vpop.f32.mrf.mxu0
        %v2249 = vadd.f32 %v2236, %v2248
        %v2250 = vpop.f32.mrf.mxu0
        %2251 = vdwg.mxu0
        %2252 = vmatpush.bf16.msra.mxu0 %v1796
        %2253 = vmatpush.bf16.msra.mxu0 %v1794
        %2254 = vmatpush.bf16.msra.mxu0 %v1792
        %2255 = vmatpush.bf16.msra.mxu0 %v1790
        %2256 = vmatpush.bf16.msra.mxu0 %v1788
        %2257 = vmatpush.bf16.msra.mxu0 %v1786
        %2258 = vmatpush.bf16.msra.mxu0 %v1784
        %2259 = vmatpush.bf16.msra.mxu0 %v1782
        %2260 = vmatmul.bf16.gmra.mxu0 %v772
        %v2261 = vpop.f32.mrf.mxu0
        %v2262 = vadd.f32 %v2249, %v2261
        %v2263 = vpop.f32.mrf.mxu0
        %2264 = vdwg.mxu0
        %2265 = vmatpush.bf16.msra.mxu0 %v1812
        %2266 = vmatpush.bf16.msra.mxu0 %v1810
        %2267 = vmatpush.bf16.msra.mxu0 %v1808
        %2268 = vmatpush.bf16.msra.mxu0 %v1806
        %2269 = vmatpush.bf16.msra.mxu0 %v1804
        %2270 = vmatpush.bf16.msra.mxu0 %v1802
        %2271 = vmatpush.bf16.msra.mxu0 %v1800
        %2272 = vmatpush.bf16.msra.mxu0 %v1798
        %2273 = vmatmul.bf16.gmra.mxu0 %v773
        %v2274 = vpop.f32.mrf.mxu0
        %v2275 = vadd.f32 %v2262, %v2274
        %v2276 = vpop.f32.mrf.mxu0
        %2277 = vdwg.mxu0
        %2278 = vmatpush.bf16.msra.mxu0 %v1573
        %2279 = vmatpush.bf16.msra.mxu0 %v1571
        %2280 = vmatpush.bf16.msra.mxu0 %v1569
        %2281 = vmatpush.bf16.msra.mxu0 %v1567
        %2282 = vmatpush.bf16.msra.mxu0 %v1565
        %2283 = vmatpush.bf16.msra.mxu0 %v1563
        %2284 = vmatpush.bf16.msra.mxu0 %v1561
        %2285 = vmatpush.bf16.msra.mxu0 %v1559
        %2286 = vmatmul.bf16.gmra.mxu0 %v758
        %v2287 = vpop.f32.mrf.mxu0
        %v2288 = vadd.f32 %v731, %v2287
        %v2289 = vpop.f32.mrf.mxu0
        %2290 = vdwg.mxu0
        %2291 = vmatpush.bf16.msra.mxu0 %v1589
        %2292 = vmatpush.bf16.msra.mxu0 %v1587
        %2293 = vmatpush.bf16.msra.mxu0 %v1585
        %2294 = vmatpush.bf16.msra.mxu0 %v1583
        %2295 = vmatpush.bf16.msra.mxu0 %v1581
        %2296 = vmatpush.bf16.msra.mxu0 %v1579
        %2297 = vmatpush.bf16.msra.mxu0 %v1577
        %2298 = vmatpush.bf16.msra.mxu0 %v1575
        %2299 = vmatmul.bf16.gmra.mxu0 %v759
        %v2300 = vpop.f32.mrf.mxu0
        %v2301 = vadd.f32 %v2288, %v2300
        %v2302 = vpop.f32.mrf.mxu0
        %2303 = vdwg.mxu0
        %2304 = vmatpush.bf16.msra.mxu0 %v1605
        %2305 = vmatpush.bf16.msra.mxu0 %v1603
        %2306 = vmatpush.bf16.msra.mxu0 %v1601
        %2307 = vmatpush.bf16.msra.mxu0 %v1599
        %2308 = vmatpush.bf16.msra.mxu0 %v1597
        %2309 = vmatpush.bf16.msra.mxu0 %v1595
        %2310 = vmatpush.bf16.msra.mxu0 %v1593
        %2311 = vmatpush.bf16.msra.mxu0 %v1591
        %2312 = vmatmul.bf16.gmra.mxu0 %v760
        %v2313 = vpop.f32.mrf.mxu0
        %v2314 = vadd.f32 %v2301, %v2313
        %v2315 = vpop.f32.mrf.mxu0
        %2316 = vdwg.mxu0
        %2317 = vmatpush.bf16.msra.mxu0 %v1621
        %2318 = vmatpush.bf16.msra.mxu0 %v1619
        %2319 = vmatpush.bf16.msra.mxu0 %v1617
        %2320 = vmatpush.bf16.msra.mxu0 %v1615
        %2321 = vmatpush.bf16.msra.mxu0 %v1613
        %2322 = vmatpush.bf16.msra.mxu0 %v1611
        %2323 = vmatpush.bf16.msra.mxu0 %v1609
        %2324 = vmatpush.bf16.msra.mxu0 %v1607
        %2325 = vmatmul.bf16.gmra.mxu0 %v761
        %v2326 = vpop.f32.mrf.mxu0
        %v2327 = vadd.f32 %v2314, %v2326
        %v2328 = vpop.f32.mrf.mxu0
        %2329 = vdwg.mxu0
        %2330 = vmatpush.bf16.msra.mxu0 %v1637
        %2331 = vmatpush.bf16.msra.mxu0 %v1635
        %2332 = vmatpush.bf16.msra.mxu0 %v1633
        %2333 = vmatpush.bf16.msra.mxu0 %v1631
        %2334 = vmatpush.bf16.msra.mxu0 %v1629
        %2335 = vmatpush.bf16.msra.mxu0 %v1627
        %2336 = vmatpush.bf16.msra.mxu0 %v1625
        %2337 = vmatpush.bf16.msra.mxu0 %v1623
        %2338 = vmatmul.bf16.gmra.mxu0 %v762
        %v2339 = vpop.f32.mrf.mxu0
        %v2340 = vadd.f32 %v2327, %v2339
        %v2341 = vpop.f32.mrf.mxu0
        %2342 = vdwg.mxu0
        %2343 = vmatpush.bf16.msra.mxu0 %v1653
        %2344 = vmatpush.bf16.msra.mxu0 %v1651
        %2345 = vmatpush.bf16.msra.mxu0 %v1649
        %2346 = vmatpush.bf16.msra.mxu0 %v1647
        %2347 = vmatpush.bf16.msra.mxu0 %v1645
        %2348 = vmatpush.bf16.msra.mxu0 %v1643
        %2349 = vmatpush.bf16.msra.mxu0 %v1641
        %2350 = vmatpush.bf16.msra.mxu0 %v1639
        %2351 = vmatmul.bf16.gmra.mxu0 %v763
        %v2352 = vpop.f32.mrf.mxu0
        %v2353 = vadd.f32 %v2340, %v2352
        %v2354 = vpop.f32.mrf.mxu0
        %2355 = vdwg.mxu0
        %2356 = vmatpush.bf16.msra.mxu0 %v1669
        %2357 = vmatpush.bf16.msra.mxu0 %v1667
        %2358 = vmatpush.bf16.msra.mxu0 %v1665
        %2359 = vmatpush.bf16.msra.mxu0 %v1663
        %2360 = vmatpush.bf16.msra.mxu0 %v1661
        %2361 = vmatpush.bf16.msra.mxu0 %v1659
        %2362 = vmatpush.bf16.msra.mxu0 %v1657
        %2363 = vmatpush.bf16.msra.mxu0 %v1655
        %2364 = vmatmul.bf16.gmra.mxu0 %v764
        %v2365 = vpop.f32.mrf.mxu0
        %v2366 = vadd.f32 %v2353, %v2365
        %v2367 = vpop.f32.mrf.mxu0
        %2368 = vdwg.mxu0
        %2369 = vmatpush.bf16.msra.mxu0 %v1685
        %2370 = vmatpush.bf16.msra.mxu0 %v1683
        %2371 = vmatpush.bf16.msra.mxu0 %v1681
        %2372 = vmatpush.bf16.msra.mxu0 %v1679
        %2373 = vmatpush.bf16.msra.mxu0 %v1677
        %2374 = vmatpush.bf16.msra.mxu0 %v1675
        %2375 = vmatpush.bf16.msra.mxu0 %v1673
        %2376 = vmatpush.bf16.msra.mxu0 %v1671
        %2377 = vmatmul.bf16.gmra.mxu0 %v765
        %v2378 = vpop.f32.mrf.mxu0
        %v2379 = vadd.f32 %v2366, %v2378
        %v2380 = vpop.f32.mrf.mxu0
        %2381 = vdwg.mxu0
        %2382 = vmatpush.bf16.msra.mxu0 %v1701
        %2383 = vmatpush.bf16.msra.mxu0 %v1699
        %2384 = vmatpush.bf16.msra.mxu0 %v1697
        %2385 = vmatpush.bf16.msra.mxu0 %v1695
        %2386 = vmatpush.bf16.msra.mxu0 %v1693
        %2387 = vmatpush.bf16.msra.mxu0 %v1691
        %2388 = vmatpush.bf16.msra.mxu0 %v1689
        %2389 = vmatpush.bf16.msra.mxu0 %v1687
        %2390 = vmatmul.bf16.gmra.mxu0 %v766
        %v2391 = vpop.f32.mrf.mxu0
        %v2392 = vadd.f32 %v2379, %v2391
        %v2393 = vpop.f32.mrf.mxu0
        %2394 = vdwg.mxu0
        %2395 = vmatpush.bf16.msra.mxu0 %v1717
        %2396 = vmatpush.bf16.msra.mxu0 %v1715
        %2397 = vmatpush.bf16.msra.mxu0 %v1713
        %2398 = vmatpush.bf16.msra.mxu0 %v1711
        %2399 = vmatpush.bf16.msra.mxu0 %v1709
        %2400 = vmatpush.bf16.msra.mxu0 %v1707
        %2401 = vmatpush.bf16.msra.mxu0 %v1705
        %2402 = vmatpush.bf16.msra.mxu0 %v1703
        %2403 = vmatmul.bf16.gmra.mxu0 %v767
        %v2404 = vpop.f32.mrf.mxu0
        %v2405 = vadd.f32 %v2392, %v2404
        %v2406 = vpop.f32.mrf.mxu0
        %2407 = vdwg.mxu0
        %2408 = vmatpush.bf16.msra.mxu0 %v1733
        %2409 = vmatpush.bf16.msra.mxu0 %v1731
        %2410 = vmatpush.bf16.msra.mxu0 %v1729
        %2411 = vmatpush.bf16.msra.mxu0 %v1727
        %2412 = vmatpush.bf16.msra.mxu0 %v1725
        %2413 = vmatpush.bf16.msra.mxu0 %v1723
        %2414 = vmatpush.bf16.msra.mxu0 %v1721
        %2415 = vmatpush.bf16.msra.mxu0 %v1719
        %2416 = vmatmul.bf16.gmra.mxu0 %v768
        %v2417 = vpop.f32.mrf.mxu0
        %v2418 = vadd.f32 %v2405, %v2417
        %v2419 = vpop.f32.mrf.mxu0
        %2420 = vdwg.mxu0
        %2421 = vmatpush.bf16.msra.mxu0 %v1749
        %2422 = vmatpush.bf16.msra.mxu0 %v1747
        %2423 = vmatpush.bf16.msra.mxu0 %v1745
        %2424 = vmatpush.bf16.msra.mxu0 %v1743
        %2425 = vmatpush.bf16.msra.mxu0 %v1741
        %2426 = vmatpush.bf16.msra.mxu0 %v1739
        %2427 = vmatpush.bf16.msra.mxu0 %v1737
        %2428 = vmatpush.bf16.msra.mxu0 %v1735
        %2429 = vmatmul.bf16.gmra.mxu0 %v769
        %v2430 = vpop.f32.mrf.mxu0
        %v2431 = vadd.f32 %v2418, %v2430
        %v2432 = vpop.f32.mrf.mxu0
        %2433 = vdwg.mxu0
        %2434 = vmatpush.bf16.msra.mxu0 %v1765
        %2435 = vmatpush.bf16.msra.mxu0 %v1763
        %2436 = vmatpush.bf16.msra.mxu0 %v1761
        %2437 = vmatpush.bf16.msra.mxu0 %v1759
        %2438 = vmatpush.bf16.msra.mxu0 %v1757
        %2439 = vmatpush.bf16.msra.mxu0 %v1755
        %2440 = vmatpush.bf16.msra.mxu0 %v1753
        %2441 = vmatpush.bf16.msra.mxu0 %v1751
        %2442 = vmatmul.bf16.gmra.mxu0 %v770
        %v2443 = vpop.f32.mrf.mxu0
        %v2444 = vadd.f32 %v2431, %v2443
        %v2445 = vpop.f32.mrf.mxu0
        %2446 = vdwg.mxu0
        %2447 = vmatpush.bf16.msra.mxu0 %v1781
        %2448 = vmatpush.bf16.msra.mxu0 %v1779
        %2449 = vmatpush.bf16.msra.mxu0 %v1777
        %2450 = vmatpush.bf16.msra.mxu0 %v1775
        %2451 = vmatpush.bf16.msra.mxu0 %v1773
        %2452 = vmatpush.bf16.msra.mxu0 %v1771
        %2453 = vmatpush.bf16.msra.mxu0 %v1769
        %2454 = vmatpush.bf16.msra.mxu0 %v1767
        %2455 = vmatmul.bf16.gmra.mxu0 %v771
        %v2456 = vpop.f32.mrf.mxu0
        %v2457 = vadd.f32 %v2444, %v2456
        %v2458 = vpop.f32.mrf.mxu0
        %2459 = vdwg.mxu0
        %2460 = vmatpush.bf16.msra.mxu0 %v1797
        %2461 = vmatpush.bf16.msra.mxu0 %v1795
        %2462 = vmatpush.bf16.msra.mxu0 %v1793
        %2463 = vmatpush.bf16.msra.mxu0 %v1791
        %2464 = vmatpush.bf16.msra.mxu0 %v1789
        %2465 = vmatpush.bf16.msra.mxu0 %v1787
        %2466 = vmatpush.bf16.msra.mxu0 %v1785
        %2467 = vmatpush.bf16.msra.mxu0 %v1783
        %2468 = vmatmul.bf16.gmra.mxu0 %v772
        %v2469 = vpop.f32.mrf.mxu0
        %v2470 = vadd.f32 %v2457, %v2469
        %v2471 = vpop.f32.mrf.mxu0
        %2472 = vdwg.mxu0
        %2473 = vmatpush.bf16.msra.mxu0 %v1813
        %2474 = vmatpush.bf16.msra.mxu0 %v1811
        %2475 = vmatpush.bf16.msra.mxu0 %v1809
        %2476 = vmatpush.bf16.msra.mxu0 %v1807
        %2477 = vmatpush.bf16.msra.mxu0 %v1805
        %2478 = vmatpush.bf16.msra.mxu0 %v1803
        %2479 = vmatpush.bf16.msra.mxu0 %v1801
        %2480 = vmatpush.bf16.msra.mxu0 %v1799
        %2481 = vmatmul.bf16.gmra.mxu0 %v773
        %v2482 = vpop.f32.mrf.mxu0
        %v2483 = vadd.f32 %v2470, %v2482
        %v2484 = vpop.f32.mrf.mxu0
        %2485 = vdwg.mxu0
        %v2486 = vmax.f32 %v2275, 0.0
        %v2487 = vmax.f32 %v2483, 0.0
        %v2488 = vld [vmem:[#allocation2] sm:$0xff]
        %v2489 = vld [vmem:[#allocation2 + $0x8] sm:$0xff]
        %v2490 = vld [vmem:[#allocation2 + $0x10] sm:$0xff]
        %v2491 = vld [vmem:[#allocation2 + $0x18] sm:$0xff]
        %v2492 = vld [vmem:[#allocation2 + $0x20] sm:$0xff]
        %v2493 = vpack.c.bf16 %v2486, %v2486
        %v2494 = vpack.c.bf16 %v2487, %v2487
        %v2495 = vld [vmem:[%s398] sm:$0xff]
        %v2496 = vld [vmem:[%s398 + $0x8] sm:$0xff]
        %v2497 = vld [vmem:[%s398 + $0x10] sm:$0xf]
        %v2498 = vld [vmem:[%s398 + $0x14] sm:$0xff]
        %v2499 = vld [vmem:[%s398 + $0x1c] sm:$0xff]
        %v2500 = vld [vmem:[%s398 + $0x24] sm:$0xf]
        %v2501 = vld [vmem:[%s398 + $0x28] sm:$0xff]
        %v2502 = vld [vmem:[%s398 + $0x30] sm:$0xff]
        %v2503 = vld [vmem:[%s398 + $0x38] sm:$0xf]
        %v2504 = vld [vmem:[%s398 + $0x3c] sm:$0xff]
        %v2505 = vld [vmem:[%s398 + $0x44] sm:$0xff]
        %v2506 = vld [vmem:[%s398 + $0x4c] sm:$0xf]
        %v2507 = vld [vmem:[%s398 + $0x50] sm:$0xff]
        %v2508 = vld [vmem:[%s398 + $0x58] sm:$0xff]
        %v2509 = vld [vmem:[%s398 + $0x60] sm:$0xf]
        %v2510 = vld [vmem:[%s398 + $0x64] sm:$0xff]
        %v2511 = vld [vmem:[%s398 + $0x6c] sm:$0xff]
        %v2512 = vld [vmem:[%s398 + $0x74] sm:$0xf]
        %v2513 = vld [vmem:[%s398 + $0x78] sm:$0xff]
        %v2514 = vld [vmem:[%s398 + $0x80] sm:$0xff]
        %v2515 = vld [vmem:[%s398 + $0x88] sm:$0xf]
        %v2516 = vld [vmem:[%s398 + $0x8c] sm:$0xff]
        %v2517 = vld [vmem:[%s398 + $0x94] sm:$0xff]
        %v2518 = vld [vmem:[%s398 + $0x9c] sm:$0xf]
        %v2519 = vld [vmem:[%s398 + $0xa0] sm:$0xff]
        %v2520 = vld [vmem:[%s398 + $0xa8] sm:$0xff]
        %v2521 = vld [vmem:[%s398 + $0xb0] sm:$0xf]
        %v2522 = vld [vmem:[%s398 + $0xb4] sm:$0xff]
        %v2523 = vld [vmem:[%s398 + $0xbc] sm:$0xff]
        %v2524 = vld [vmem:[%s398 + $0xc4] sm:$0xf]
        %v2525 = vld [vmem:[%s398 + $0xc8] sm:$0xff]
        %v2526 = vld [vmem:[%s398 + $0xd0] sm:$0xff]
        %v2527 = vld [vmem:[%s398 + $0xd8] sm:$0xf]
        %v2528 = vld [vmem:[%s398 + $0xdc] sm:$0xff]
        %v2529 = vld [vmem:[%s398 + $0xe4] sm:$0xff]
        %v2530 = vld [vmem:[%s398 + $0xec] sm:$0xf]
        %v2531 = vld [vmem:[%s398 + $0xf0] sm:$0xff]
        %v2532 = vld [vmem:[%s398 + $0xf8] sm:$0xff]
        %v2533 = vld [vmem:[%s398 + $0x100] sm:$0xf]
        %v2534 = vld [vmem:[%s398 + $0x104] sm:$0xff]
        %v2535 = vld [vmem:[%s398 + $0x10c] sm:$0xff]
        %v2536 = vld [vmem:[%s398 + $0x114] sm:$0xf]
        %v2537 = vld [vmem:[%s398 + $0x118] sm:$0xff]
        %v2538 = vld [vmem:[%s398 + $0x120] sm:$0xff]
        %v2539 = vld [vmem:[%s398 + $0x128] sm:$0xf]
        %v2540 = vld [vmem:[%s398 + $0x12c] sm:$0xff]
        %v2541 = vld [vmem:[%s398 + $0x134] sm:$0xff]
        %v2542 = vld [vmem:[%s398 + $0x13c] sm:$0xf]
        %v2543 = vld [vmem:[%s398 + $0x140] sm:$0xff]
        %v2544 = vld [vmem:[%s398 + $0x148] sm:$0xff]
        %v2545 = vld [vmem:[%s398 + $0x150] sm:$0xf]
        %v2546 = vld [vmem:[%s398 + $0x154] sm:$0xff]
        %v2547 = vld [vmem:[%s398 + $0x15c] sm:$0xff]
        %v2548 = vld [vmem:[%s398 + $0x164] sm:$0xf]
        %v2549 = vld [vmem:[%s398 + $0x168] sm:$0xff]
        %v2550 = vld [vmem:[%s398 + $0x170] sm:$0xff]
        %v2551 = vld [vmem:[%s398 + $0x178] sm:$0xf]
        %v2552 = vld [vmem:[%s398 + $0x17c] sm:$0xff]
        %v2553 = vld [vmem:[%s398 + $0x184] sm:$0xff]
        %v2554 = vld [vmem:[%s398 + $0x18c] sm:$0xf]
        %v2555 = vld [vmem:[%s398 + $0x190] sm:$0xff]
        %v2556 = vld [vmem:[%s398 + $0x198] sm:$0xff]
        %v2557 = vld [vmem:[%s398 + $0x1a0] sm:$0xf]
        %v2558 = vld [vmem:[%s398 + $0x1a4] sm:$0xff]
        %v2559 = vld [vmem:[%s398 + $0x1ac] sm:$0xff]
        %v2560 = vld [vmem:[%s398 + $0x1b4] sm:$0xf]
        %v2561 = vld [vmem:[%s398 + $0x1b8] sm:$0xff]
        %v2562 = vld [vmem:[%s398 + $0x1c0] sm:$0xff]
        %v2563 = vld [vmem:[%s398 + $0x1c8] sm:$0xf]
        %v2564 = vld [vmem:[%s398 + $0x1cc] sm:$0xff]
        %v2565 = vld [vmem:[%s398 + $0x1d4] sm:$0xff]
        %v2566 = vld [vmem:[%s398 + $0x1dc] sm:$0xf]
        %v2567 = vld [vmem:[%s398 + $0x1e0] sm:$0xff]
        %v2568 = vld [vmem:[%s398 + $0x1e8] sm:$0xff]
        %v2569 = vld [vmem:[%s398 + $0x1f0] sm:$0xf]
        %v2570 = vld [vmem:[%s398 + $0x1f4] sm:$0xff]
        %v2571 = vld [vmem:[%s398 + $0x1fc] sm:$0xff]
        %v2572 = vld [vmem:[%s398 + $0x204] sm:$0xf]
        %v2573 = vld [vmem:[%s398 + $0x208] sm:$0xff]
        %v2574 = vld [vmem:[%s398 + $0x210] sm:$0xff]
        %v2575 = vld [vmem:[%s398 + $0x218] sm:$0xf]
        %v2576 = vld [vmem:[%s398 + $0x21c] sm:$0xff]
        %v2577 = vld [vmem:[%s398 + $0x224] sm:$0xff]
        %v2578 = vld [vmem:[%s398 + $0x22c] sm:$0xf]
        %v2579 = vld [vmem:[%s398 + $0x230] sm:$0xff]
        %v2580 = vld [vmem:[%s398 + $0x238] sm:$0xff]
        %v2581 = vld [vmem:[%s398 + $0x240] sm:$0xf]
        %v2582 = vld [vmem:[%s398 + $0x244] sm:$0xff]
        %v2583 = vld [vmem:[%s398 + $0x24c] sm:$0xff]
        %v2584 = vld [vmem:[%s398 + $0x254] sm:$0xf]
        %v2585 = vld [vmem:[%s398 + $0x258] sm:$0xff]
        %v2586 = vld [vmem:[%s398 + $0x260] sm:$0xff]
        %v2587 = vld [vmem:[%s398 + $0x268] sm:$0xf]
        %v2588 = vld [vmem:[%s398 + $0x26c] sm:$0xff]
        %v2589 = vld [vmem:[%s398 + $0x274] sm:$0xff]
        %v2590 = vld [vmem:[%s398 + $0x27c] sm:$0xf]
        %v2687 = vunpack.c.l.b16 %v2495
        %v2688 = vunpack.c.h.b16 %v2495
        %v2689 = vunpack.c.l.b16 %v2496
        %v2690 = vunpack.c.h.b16 %v2496
        %v2691 = vunpack.c.l.b16 %v2497
        %v2692 = vunpack.c.l.b16 %v2498
        %v2693 = vunpack.c.h.b16 %v2498
        %v2694 = vunpack.c.l.b16 %v2499
        %v2695 = vunpack.c.h.b16 %v2499
        %v2696 = vunpack.c.l.b16 %v2500
        %v2697 = vunpack.c.l.b16 %v2501
        %v2698 = vunpack.c.h.b16 %v2501
        %v2699 = vunpack.c.l.b16 %v2502
        %v2700 = vunpack.c.h.b16 %v2502
        %v2701 = vunpack.c.l.b16 %v2503
        %v2702 = vunpack.c.l.b16 %v2504
        %v2703 = vunpack.c.h.b16 %v2504
        %v2704 = vunpack.c.l.b16 %v2505
        %v2705 = vunpack.c.h.b16 %v2505
        %v2706 = vunpack.c.l.b16 %v2506
        %v2707 = vunpack.c.l.b16 %v2507
        %v2708 = vunpack.c.h.b16 %v2507
        %v2709 = vunpack.c.l.b16 %v2508
        %v2710 = vunpack.c.h.b16 %v2508
        %v2711 = vunpack.c.l.b16 %v2509
        %v2712 = vunpack.c.l.b16 %v2510
        %v2713 = vunpack.c.h.b16 %v2510
        %v2714 = vunpack.c.l.b16 %v2511
        %v2715 = vunpack.c.h.b16 %v2511
        %v2716 = vunpack.c.l.b16 %v2512
        %v2717 = vunpack.c.l.b16 %v2513
        %v2718 = vunpack.c.h.b16 %v2513
        %v2719 = vunpack.c.l.b16 %v2514
        %v2720 = vunpack.c.h.b16 %v2514
        %v2721 = vunpack.c.l.b16 %v2515
        %v2722 = vunpack.c.l.b16 %v2516
        %v2723 = vunpack.c.h.b16 %v2516
        %v2724 = vunpack.c.l.b16 %v2517
        %v2725 = vunpack.c.h.b16 %v2517
        %v2726 = vunpack.c.l.b16 %v2518
        %v2727 = vunpack.c.l.b16 %v2519
        %v2728 = vunpack.c.h.b16 %v2519
        %v2729 = vunpack.c.l.b16 %v2520
        %v2730 = vunpack.c.h.b16 %v2520
        %v2731 = vunpack.c.l.b16 %v2521
        %v2732 = vunpack.c.l.b16 %v2522
        %v2733 = vunpack.c.h.b16 %v2522
        %v2734 = vunpack.c.l.b16 %v2523
        %v2735 = vunpack.c.h.b16 %v2523
        %v2736 = vunpack.c.l.b16 %v2524
        %v2737 = vunpack.c.l.b16 %v2525
        %v2738 = vunpack.c.h.b16 %v2525
        %v2739 = vunpack.c.l.b16 %v2526
        %v2740 = vunpack.c.h.b16 %v2526
        %v2741 = vunpack.c.l.b16 %v2527
        %v2742 = vunpack.c.l.b16 %v2528
        %v2743 = vunpack.c.h.b16 %v2528
        %v2744 = vunpack.c.l.b16 %v2529
        %v2745 = vunpack.c.h.b16 %v2529
        %v2746 = vunpack.c.l.b16 %v2530
        %v2747 = vunpack.c.l.b16 %v2531
        %v2748 = vunpack.c.h.b16 %v2531
        %v2749 = vunpack.c.l.b16 %v2532
        %v2750 = vunpack.c.h.b16 %v2532
        %v2751 = vunpack.c.l.b16 %v2533
        %v2752 = vunpack.c.l.b16 %v2534
        %v2753 = vunpack.c.h.b16 %v2534
        %v2754 = vunpack.c.l.b16 %v2535
        %v2755 = vunpack.c.h.b16 %v2535
        %v2756 = vunpack.c.l.b16 %v2536
        %v2757 = vunpack.c.l.b16 %v2537
        %v2758 = vunpack.c.h.b16 %v2537
        %v2759 = vunpack.c.l.b16 %v2538
        %v2760 = vunpack.c.h.b16 %v2538
        %v2761 = vunpack.c.l.b16 %v2539
        %v2762 = vunpack.c.l.b16 %v2540
        %v2763 = vunpack.c.h.b16 %v2540
        %v2764 = vunpack.c.l.b16 %v2541
        %v2765 = vunpack.c.h.b16 %v2541
        %v2766 = vunpack.c.l.b16 %v2542
        %v2767 = vunpack.c.l.b16 %v2543
        %v2768 = vunpack.c.h.b16 %v2543
        %v2769 = vunpack.c.l.b16 %v2544
        %v2770 = vunpack.c.h.b16 %v2544
        %v2771 = vunpack.c.l.b16 %v2545
        %v2772 = vunpack.c.l.b16 %v2546
        %v2773 = vunpack.c.h.b16 %v2546
        %v2774 = vunpack.c.l.b16 %v2547
        %v2775 = vunpack.c.h.b16 %v2547
        %v2776 = vunpack.c.l.b16 %v2548
        %v2777 = vunpack.c.l.b16 %v2549
        %v2778 = vunpack.c.h.b16 %v2549
        %v2779 = vunpack.c.l.b16 %v2550
        %v2780 = vunpack.c.h.b16 %v2550
        %v2781 = vunpack.c.l.b16 %v2551
        %v2782 = vunpack.c.l.b16 %v2552
        %v2783 = vunpack.c.h.b16 %v2552
        %v2784 = vunpack.c.l.b16 %v2553
        %v2785 = vunpack.c.h.b16 %v2553
        %v2786 = vunpack.c.l.b16 %v2554
        %v2787 = vunpack.c.l.b16 %v2555
        %v2788 = vunpack.c.h.b16 %v2555
        %v2789 = vunpack.c.l.b16 %v2556
        %v2790 = vunpack.c.h.b16 %v2556
        %v2791 = vunpack.c.l.b16 %v2557
        %v2792 = vunpack.c.l.b16 %v2558
        %v2793 = vunpack.c.h.b16 %v2558
        %v2794 = vunpack.c.l.b16 %v2559
        %v2795 = vunpack.c.h.b16 %v2559
        %v2796 = vunpack.c.l.b16 %v2560
        %v2797 = vunpack.c.l.b16 %v2561
        %v2798 = vunpack.c.h.b16 %v2561
        %v2799 = vunpack.c.l.b16 %v2562
        %v2800 = vunpack.c.h.b16 %v2562
        %v2801 = vunpack.c.l.b16 %v2563
        %v2802 = vunpack.c.l.b16 %v2564
        %v2803 = vunpack.c.h.b16 %v2564
        %v2804 = vunpack.c.l.b16 %v2565
        %v2805 = vunpack.c.h.b16 %v2565
        %v2806 = vunpack.c.l.b16 %v2566
        %v2807 = vunpack.c.l.b16 %v2567
        %v2808 = vunpack.c.h.b16 %v2567
        %v2809 = vunpack.c.l.b16 %v2568
        %v2810 = vunpack.c.h.b16 %v2568
        %v2811 = vunpack.c.l.b16 %v2569
        %v2812 = vunpack.c.l.b16 %v2570
        %v2813 = vunpack.c.h.b16 %v2570
        %v2814 = vunpack.c.l.b16 %v2571
        %v2815 = vunpack.c.h.b16 %v2571
        %v2816 = vunpack.c.l.b16 %v2572
        %v2817 = vunpack.c.l.b16 %v2573
        %v2818 = vunpack.c.h.b16 %v2573
        %v2819 = vunpack.c.l.b16 %v2574
        %v2820 = vunpack.c.h.b16 %v2574
        %v2821 = vunpack.c.l.b16 %v2575
        %v2822 = vunpack.c.l.b16 %v2576
        %v2823 = vunpack.c.h.b16 %v2576
        %v2824 = vunpack.c.l.b16 %v2577
        %v2825 = vunpack.c.h.b16 %v2577
        %v2826 = vunpack.c.l.b16 %v2578
        %v2827 = vunpack.c.l.b16 %v2579
        %v2828 = vunpack.c.h.b16 %v2579
        %v2829 = vunpack.c.l.b16 %v2580
        %v2830 = vunpack.c.h.b16 %v2580
        %v2831 = vunpack.c.l.b16 %v2581
        %v2832 = vunpack.c.l.b16 %v2582
        %v2833 = vunpack.c.h.b16 %v2582
        %v2834 = vunpack.c.l.b16 %v2583
        %v2835 = vunpack.c.h.b16 %v2583
        %v2836 = vunpack.c.l.b16 %v2584
        %v2837 = vunpack.c.l.b16 %v2585
        %v2838 = vunpack.c.h.b16 %v2585
        %v2839 = vunpack.c.l.b16 %v2586
        %v2840 = vunpack.c.h.b16 %v2586
        %v2841 = vunpack.c.l.b16 %v2587
        %v2842 = vunpack.c.l.b16 %v2588
        %v2843 = vunpack.c.h.b16 %v2588
        %v2844 = vunpack.c.l.b16 %v2589
        %v2845 = vunpack.c.h.b16 %v2589
        %v2846 = vunpack.c.l.b16 %v2590
        %v2847 = vpack.c.b16 %v2692, %v2687
        %v2848 = vpack.c.b16 %v2693, %v2688
        %v2849 = vpack.c.b16 %v2694, %v2689
        %v2850 = vpack.c.b16 %v2695, %v2690
        %v2851 = vpack.c.b16 %v2696, %v2691
        %v2852 = vpack.c.b16 %v2702, %v2697
        %v2853 = vpack.c.b16 %v2703, %v2698
        %v2854 = vpack.c.b16 %v2704, %v2699
        %v2855 = vpack.c.b16 %v2705, %v2700
        %v2856 = vpack.c.b16 %v2706, %v2701
        %v2857 = vpack.c.b16 %v2712, %v2707
        %v2858 = vpack.c.b16 %v2713, %v2708
        %v2859 = vpack.c.b16 %v2714, %v2709
        %v2860 = vpack.c.b16 %v2715, %v2710
        %v2861 = vpack.c.b16 %v2716, %v2711
        %v2862 = vpack.c.b16 %v2722, %v2717
        %v2863 = vpack.c.b16 %v2723, %v2718
        %v2864 = vpack.c.b16 %v2724, %v2719
        %v2865 = vpack.c.b16 %v2725, %v2720
        %v2866 = vpack.c.b16 %v2726, %v2721
        %v2867 = vpack.c.b16 %v2732, %v2727
        %v2868 = vpack.c.b16 %v2733, %v2728
        %v2869 = vpack.c.b16 %v2734, %v2729
        %v2870 = vpack.c.b16 %v2735, %v2730
        %v2871 = vpack.c.b16 %v2736, %v2731
        %v2872 = vpack.c.b16 %v2742, %v2737
        %v2873 = vpack.c.b16 %v2743, %v2738
        %v2874 = vpack.c.b16 %v2744, %v2739
        %v2875 = vpack.c.b16 %v2745, %v2740
        %v2876 = vpack.c.b16 %v2746, %v2741
        %v2877 = vpack.c.b16 %v2752, %v2747
        %v2878 = vpack.c.b16 %v2753, %v2748
        %v2879 = vpack.c.b16 %v2754, %v2749
        %v2880 = vpack.c.b16 %v2755, %v2750
        %v2881 = vpack.c.b16 %v2756, %v2751
        %v2882 = vpack.c.b16 %v2762, %v2757
        %v2883 = vpack.c.b16 %v2763, %v2758
        %v2884 = vpack.c.b16 %v2764, %v2759
        %v2885 = vpack.c.b16 %v2765, %v2760
        %v2886 = vpack.c.b16 %v2766, %v2761
        %v2887 = vpack.c.b16 %v2772, %v2767
        %v2888 = vpack.c.b16 %v2773, %v2768
        %v2889 = vpack.c.b16 %v2774, %v2769
        %v2890 = vpack.c.b16 %v2775, %v2770
        %v2891 = vpack.c.b16 %v2776, %v2771
        %v2892 = vpack.c.b16 %v2782, %v2777
        %v2893 = vpack.c.b16 %v2783, %v2778
        %v2894 = vpack.c.b16 %v2784, %v2779
        %v2895 = vpack.c.b16 %v2785, %v2780
        %v2896 = vpack.c.b16 %v2786, %v2781
        %v2897 = vpack.c.b16 %v2792, %v2787
        %v2898 = vpack.c.b16 %v2793, %v2788
        %v2899 = vpack.c.b16 %v2794, %v2789
        %v2900 = vpack.c.b16 %v2795, %v2790
        %v2901 = vpack.c.b16 %v2796, %v2791
        %v2902 = vpack.c.b16 %v2802, %v2797
        %v2903 = vpack.c.b16 %v2803, %v2798
        %v2904 = vpack.c.b16 %v2804, %v2799
        %v2905 = vpack.c.b16 %v2805, %v2800
        %v2906 = vpack.c.b16 %v2806, %v2801
        %v2907 = vpack.c.b16 %v2812, %v2807
        %v2908 = vpack.c.b16 %v2813, %v2808
        %v2909 = vpack.c.b16 %v2814, %v2809
        %v2910 = vpack.c.b16 %v2815, %v2810
        %v2911 = vpack.c.b16 %v2816, %v2811
        %v2912 = vpack.c.b16 %v2822, %v2817
        %v2913 = vpack.c.b16 %v2823, %v2818
        %v2914 = vpack.c.b16 %v2824, %v2819
        %v2915 = vpack.c.b16 %v2825, %v2820
        %v2916 = vpack.c.b16 %v2826, %v2821
        %v2917 = vpack.c.b16 %v2832, %v2827
        %v2918 = vpack.c.b16 %v2833, %v2828
        %v2919 = vpack.c.b16 %v2834, %v2829
        %v2920 = vpack.c.b16 %v2835, %v2830
        %v2921 = vpack.c.b16 %v2836, %v2831
        %v2922 = vpack.c.b16 %v2842, %v2837
        %v2923 = vpack.c.b16 %v2843, %v2838
        %v2924 = vpack.c.b16 %v2844, %v2839
        %v2925 = vpack.c.b16 %v2845, %v2840
        %v2926 = vpack.c.b16 %v2846, %v2841
        %3007 = vmatpush.bf16.msra.mxu0 %v2882
        %3008 = vmatpush.bf16.msra.mxu0 %v2877
        %3009 = vmatpush.bf16.msra.mxu0 %v2872
        %3010 = vmatpush.bf16.msra.mxu0 %v2867
        %3011 = vmatpush.bf16.msra.mxu0 %v2862
        %3012 = vmatpush.bf16.msra.mxu0 %v2857
        %3013 = vmatpush.bf16.msra.mxu0 %v2852
        %3014 = vmatpush.bf16.msra.mxu0 %v2847
        %3015 = vmatmul.bf16.gmra.mxu0 %v2493
        %v3016 = vpop.f32.mrf.mxu0
        %v3017 = vadd.f32 0.0, %v3016
        %v3018 = vpop.f32.mrf.mxu0
        %3019 = vdwg.mxu0
        %3020 = vmatpush.bf16.msra.mxu0 %v2922
        %3021 = vmatpush.bf16.msra.mxu0 %v2917
        %3022 = vmatpush.bf16.msra.mxu0 %v2912
        %3023 = vmatpush.bf16.msra.mxu0 %v2907
        %3024 = vmatpush.bf16.msra.mxu0 %v2902
        %3025 = vmatpush.bf16.msra.mxu0 %v2897
        %3026 = vmatpush.bf16.msra.mxu0 %v2892
        %3027 = vmatpush.bf16.msra.mxu0 %v2887
        %3028 = vmatmul.bf16.gmra.mxu0 %v2494
        %v3029 = vpop.f32.mrf.mxu0
        %v3030 = vadd.f32 %v3017, %v3029
        %v3031 = vpop.f32.mrf.mxu0
        %3032 = vdwg.mxu0
        %3033 = vmatpush.bf16.msra.mxu0 %v2883
        %3034 = vmatpush.bf16.msra.mxu0 %v2878
        %3035 = vmatpush.bf16.msra.mxu0 %v2873
        %3036 = vmatpush.bf16.msra.mxu0 %v2868
        %3037 = vmatpush.bf16.msra.mxu0 %v2863
        %3038 = vmatpush.bf16.msra.mxu0 %v2858
        %3039 = vmatpush.bf16.msra.mxu0 %v2853
        %3040 = vmatpush.bf16.msra.mxu0 %v2848
        %3041 = vmatmul.bf16.gmra.mxu0 %v2493
        %v3042 = vpop.f32.mrf.mxu0
        %v3043 = vadd.f32 0.0, %v3042
        %v3044 = vpop.f32.mrf.mxu0
        %3045 = vdwg.mxu0
        %3046 = vmatpush.bf16.msra.mxu0 %v2923
        %3047 = vmatpush.bf16.msra.mxu0 %v2918
        %3048 = vmatpush.bf16.msra.mxu0 %v2913
        %3049 = vmatpush.bf16.msra.mxu0 %v2908
        %3050 = vmatpush.bf16.msra.mxu0 %v2903
        %3051 = vmatpush.bf16.msra.mxu0 %v2898
        %3052 = vmatpush.bf16.msra.mxu0 %v2893
        %3053 = vmatpush.bf16.msra.mxu0 %v2888
        %3054 = vmatmul.bf16.gmra.mxu0 %v2494
        %v3055 = vpop.f32.mrf.mxu0
        %v3056 = vadd.f32 %v3043, %v3055
        %v3057 = vpop.f32.mrf.mxu0
        %3058 = vdwg.mxu0
        %3059 = vmatpush.bf16.msra.mxu0 %v2884
        %3060 = vmatpush.bf16.msra.mxu0 %v2879
        %3061 = vmatpush.bf16.msra.mxu0 %v2874
        %3062 = vmatpush.bf16.msra.mxu0 %v2869
        %3063 = vmatpush.bf16.msra.mxu0 %v2864
        %3064 = vmatpush.bf16.msra.mxu0 %v2859
        %3065 = vmatpush.bf16.msra.mxu0 %v2854
        %3066 = vmatpush.bf16.msra.mxu0 %v2849
        %3067 = vmatmul.bf16.gmra.mxu0 %v2493
        %v3068 = vpop.f32.mrf.mxu0
        %v3069 = vadd.f32 0.0, %v3068
        %v3070 = vpop.f32.mrf.mxu0
        %3071 = vdwg.mxu0
        %3072 = vmatpush.bf16.msra.mxu0 %v2924
        %3073 = vmatpush.bf16.msra.mxu0 %v2919
        %3074 = vmatpush.bf16.msra.mxu0 %v2914
        %3075 = vmatpush.bf16.msra.mxu0 %v2909
        %3076 = vmatpush.bf16.msra.mxu0 %v2904
        %3077 = vmatpush.bf16.msra.mxu0 %v2899
        %3078 = vmatpush.bf16.msra.mxu0 %v2894
        %3079 = vmatpush.bf16.msra.mxu0 %v2889
        %3080 = vmatmul.bf16.gmra.mxu0 %v2494
        %v3081 = vpop.f32.mrf.mxu0
        %v3082 = vadd.f32 %v3069, %v3081
        %v3083 = vpop.f32.mrf.mxu0
        %3084 = vdwg.mxu0
        %3085 = vmatpush.bf16.msra.mxu0 %v2885
        %3086 = vmatpush.bf16.msra.mxu0 %v2880
        %3087 = vmatpush.bf16.msra.mxu0 %v2875
        %3088 = vmatpush.bf16.msra.mxu0 %v2870
        %3089 = vmatpush.bf16.msra.mxu0 %v2865
        %3090 = vmatpush.bf16.msra.mxu0 %v2860
        %3091 = vmatpush.bf16.msra.mxu0 %v2855
        %3092 = vmatpush.bf16.msra.mxu0 %v2850
        %3093 = vmatmul.bf16.gmra.mxu0 %v2493
        %v3094 = vpop.f32.mrf.mxu0
        %v3095 = vadd.f32 0.0, %v3094
        %v3096 = vpop.f32.mrf.mxu0
        %3097 = vdwg.mxu0
        %3098 = vmatpush.bf16.msra.mxu0 %v2925
        %3099 = vmatpush.bf16.msra.mxu0 %v2920
        %3100 = vmatpush.bf16.msra.mxu0 %v2915
        %3101 = vmatpush.bf16.msra.mxu0 %v2910
        %3102 = vmatpush.bf16.msra.mxu0 %v2905
        %3103 = vmatpush.bf16.msra.mxu0 %v2900
        %3104 = vmatpush.bf16.msra.mxu0 %v2895
        %3105 = vmatpush.bf16.msra.mxu0 %v2890
        %3106 = vmatmul.bf16.gmra.mxu0 %v2494
        %v3107 = vpop.f32.mrf.mxu0
        %v3108 = vadd.f32 %v3095, %v3107
        %v3109 = vpop.f32.mrf.mxu0
        %3110 = vdwg.mxu0
        %3111 = vmatpush.bf16.msra.mxu0 %v2886
        %3112 = vmatpush.bf16.msra.mxu0 %v2881
        %3113 = vmatpush.bf16.msra.mxu0 %v2876
        %3114 = vmatpush.bf16.msra.mxu0 %v2871
        %3115 = vmatpush.bf16.msra.mxu0 %v2866
        %3116 = vmatpush.bf16.msra.mxu0 %v2861
        %3117 = vmatpush.bf16.msra.mxu0 %v2856
        %3118 = vmatpush.bf16.msra.mxu0 %v2851
        %3119 = vmatmul.bf16.gmra.mxu0 %v2493
        %v3120 = vpop.f32.mrf.mxu0
        %v3121 = vadd.f32 0.0, %v3120
        %v3122 = vpop.f32.mrf.mxu0
        %3123 = vdwg.mxu0
        %3124 = vmatpush.bf16.msra.mxu0 %v2926
        %3125 = vmatpush.bf16.msra.mxu0 %v2921
        %3126 = vmatpush.bf16.msra.mxu0 %v2916
        %3127 = vmatpush.bf16.msra.mxu0 %v2911
        %3128 = vmatpush.bf16.msra.mxu0 %v2906
        %3129 = vmatpush.bf16.msra.mxu0 %v2901
        %3130 = vmatpush.bf16.msra.mxu0 %v2896
        %3131 = vmatpush.bf16.msra.mxu0 %v2891
        %3132 = vmatmul.bf16.gmra.mxu0 %v2494
        %v3133 = vpop.f32.mrf.mxu0
        %v3134 = vadd.f32 %v3121, %v3133
        %v3135 = vpop.f32.mrf.mxu0
        %3136 = vdwg.mxu0
        %v3137 = vadd.f32 %v2488, %v3030
        %v3138 = vadd.f32 %v2489, %v3056
        %v3139 = vadd.f32 %v2490, %v3082
        %v3140 = vadd.f32 %v2491, %v3108
        %v3141 = vadd.f32 %v2492, %v3134
        %3142 = vst [vmem:[#allocation2] sm:$0xff] %v3137
        %3143 = vst [vmem:[#allocation2 + $0x8] sm:$0xff] %v3138
        %3144 = vst [vmem:[#allocation2 + $0x10] sm:$0xff] %v3139
        %3145 = vst [vmem:[#allocation2 + $0x18] sm:$0xff] %v3140
        %3146 = vst [vmem:[#allocation2 + $0x20] sm:$0xff] %v3141
        %p3147 = scmp.eq.s32.totalorder %s30, 3
        // Predicated region
        $region81: #{tpu_custom_call.1} parent=47 // pred_check
          %p3148 = pneg %p3147
        $region82: #{tpu_custom_call.1} parent=47 // pred_check_branch
          %3150 = sbr.rel (%p3148) target = $region84
        $region83: #{tpu_custom_call.1} parent=47 // pred_region
          %v3151 = vld [vmem:[#allocation2] sm:$0xff]
          %v3152 = vld [vmem:[#allocation2 + $0x8] sm:$0xff]
          %v3153 = vld [vmem:[#allocation2 + $0x10] sm:$0xff]
          %v3154 = vld [vmem:[#allocation2 + $0x18] sm:$0xff]
          %v3155 = vld [vmem:[#allocation2 + $0x20] sm:$0xff]
          %v3156 = vld [vmem:[#allocation11] sm:$0x1f]
          %v3158 = vperm.slane %v3156, 0
          %v3159 = vperm.slane %v3156, 1
          %v3160 = vperm.slane %v3156, 2
          %v3161 = vperm.slane %v3156, 3
          %v3162 = vperm.slane %v3156, 4
          %v3168 = vadd.f32 %v3151, %v3158
          %v3169 = vadd.f32 %v3152, %v3159
          %v3170 = vadd.f32 %v3153, %v3160
          %v3171 = vadd.f32 %v3154, %v3161
          %v3172 = vadd.f32 %v3155, %v3162
          %3173 = vst [vmem:[#allocation15] sm:$0xff] %v3172
          %vm3174 = vcmp.ge.f32.partialorder %v3168, 0.0
          %vm3175 = vcmp.ge.f32.partialorder %v3169, 0.0
          %vm3176 = vcmp.ge.f32.partialorder %v3170, 0.0
          %vm3177 = vcmp.ge.f32.partialorder %v3171, 0.0
          %v3178 = vmul.f32 %v3168, 0.2
          %v3179 = vmul.f32 %v3169, 0.2
          %v3180 = vmul.f32 %v3170, 0.2
          %v3181 = vmul.f32 %v3171, 0.2
          %v3182 = vsel %vm3174, %v3168, %v3178
          %v3183 = vsel %vm3175, %v3169, %v3179
          %v3184 = vsel %vm3176, %v3170, %v3180
          %v3185 = vsel %vm3177, %v3171, %v3181
          %v3186 = vpack.c.bf16 %v3182, %v3182
          %v3187 = vpack.c.bf16 %v3183, %v3183
          %v3188 = vpack.c.bf16 %v3184, %v3184
          %v3189 = vpack.c.bf16 %v3185, %v3185
          %v3190 = vld [vmem:[#allocation12] sm:$0xf]
          %v3191 = vld [vmem:[#allocation12 + $0x4] sm:$0xf]
          %v3192 = vld [vmem:[#allocation12 + $0x8] sm:$0xf]
          %v3193 = vld [vmem:[#allocation12 + $0xc] sm:$0xf]
          %v3194 = vld [vmem:[#allocation12 + $0x10] sm:$0xf]
          %v3195 = vld [vmem:[#allocation12 + $0x14] sm:$0xf]
          %v3196 = vld [vmem:[#allocation12 + $0x18] sm:$0xf]
          %v3197 = vld [vmem:[#allocation12 + $0x1c] sm:$0xf]
          %v3198 = vld [vmem:[#allocation12 + $0x20] sm:$0xf]
          %v3199 = vld [vmem:[#allocation12 + $0x24] sm:$0xf]
          %v3200 = vld [vmem:[#allocation12 + $0x28] sm:$0xf]
          %v3201 = vld [vmem:[#allocation12 + $0x2c] sm:$0xf]
          %v3202 = vld [vmem:[#allocation12 + $0x30] sm:$0xf]
          %v3203 = vld [vmem:[#allocation12 + $0x34] sm:$0xf]
          %v3204 = vld [vmem:[#allocation12 + $0x38] sm:$0xf]
          %v3205 = vld [vmem:[#allocation12 + $0x3c] sm:$0xf]
          %v3206 = vld [vmem:[#allocation12 + $0x40] sm:$0xf]
          %v3207 = vld [vmem:[#allocation12 + $0x44] sm:$0xf]
          %v3208 = vld [vmem:[#allocation12 + $0x48] sm:$0xf]
          %v3209 = vld [vmem:[#allocation12 + $0x4c] sm:$0xf]
          %v3210 = vld [vmem:[#allocation12 + $0x50] sm:$0xf]
          %v3211 = vld [vmem:[#allocation12 + $0x54] sm:$0xf]
          %v3212 = vld [vmem:[#allocation12 + $0x58] sm:$0xf]
          %v3213 = vld [vmem:[#allocation12 + $0x5c] sm:$0xf]
          %v3214 = vld [vmem:[#allocation12 + $0x60] sm:$0xf]
          %v3215 = vld [vmem:[#allocation12 + $0x64] sm:$0xf]
          %v3216 = vld [vmem:[#allocation12 + $0x68] sm:$0xf]
          %v3217 = vld [vmem:[#allocation12 + $0x6c] sm:$0xf]
          %v3218 = vld [vmem:[#allocation12 + $0x70] sm:$0xf]
          %v3219 = vld [vmem:[#allocation12 + $0x74] sm:$0xf]
          %v3220 = vld [vmem:[#allocation12 + $0x78] sm:$0xf]
          %v3221 = vld [vmem:[#allocation12 + $0x7c] sm:$0xf]
          %v3222 = vld [vmem:[#allocation12 + $0x80] sm:$0xf]
          %v3223 = vld [vmem:[#allocation12 + $0x84] sm:$0xf]
          %v3224 = vld [vmem:[#allocation12 + $0x88] sm:$0xf]
          %v3225 = vld [vmem:[#allocation12 + $0x8c] sm:$0xf]
          %v3226 = vld [vmem:[#allocation12 + $0x90] sm:$0xf]
          %v3227 = vld [vmem:[#allocation12 + $0x94] sm:$0xf]
          %v3228 = vld [vmem:[#allocation12 + $0x98] sm:$0xf]
          %v3229 = vld [vmem:[#allocation12 + $0x9c] sm:$0xf]
          %v3230 = vld [vmem:[#allocation12 + $0xa0] sm:$0xf]
          %v3231 = vld [vmem:[#allocation12 + $0xa4] sm:$0xf]
          %v3232 = vld [vmem:[#allocation12 + $0xa8] sm:$0xf]
          %v3233 = vld [vmem:[#allocation12 + $0xac] sm:$0xf]
          %v3234 = vld [vmem:[#allocation12 + $0xb0] sm:$0xf]
          %v3235 = vld [vmem:[#allocation12 + $0xb4] sm:$0xf]
          %v3236 = vld [vmem:[#allocation12 + $0xb8] sm:$0xf]
          %v3237 = vld [vmem:[#allocation12 + $0xbc] sm:$0xf]
          %v3238 = vld [vmem:[#allocation12 + $0xc0] sm:$0xf]
          %v3239 = vld [vmem:[#allocation12 + $0xc4] sm:$0xf]
          %v3240 = vld [vmem:[#allocation12 + $0xc8] sm:$0xf]
          %v3241 = vld [vmem:[#allocation12 + $0xcc] sm:$0xf]
          %v3242 = vld [vmem:[#allocation12 + $0xd0] sm:$0xf]
          %v3243 = vld [vmem:[#allocation12 + $0xd4] sm:$0xf]
          %v3244 = vld [vmem:[#allocation12 + $0xd8] sm:$0xf]
          %v3245 = vld [vmem:[#allocation12 + $0xdc] sm:$0xf]
          %v3246 = vld [vmem:[#allocation12 + $0xe0] sm:$0xf]
          %v3247 = vld [vmem:[#allocation12 + $0xe4] sm:$0xf]
          %v3248 = vld [vmem:[#allocation12 + $0xe8] sm:$0xf]
          %v3249 = vld [vmem:[#allocation12 + $0xec] sm:$0xf]
          %v3250 = vld [vmem:[#allocation12 + $0xf0] sm:$0xf]
          %v3251 = vld [vmem:[#allocation12 + $0xf4] sm:$0xf]
          %v3252 = vld [vmem:[#allocation12 + $0xf8] sm:$0xf]
          %v3253 = vld [vmem:[#allocation12 + $0xfc] sm:$0xf]
          %v3254 = vld [vmem:[#allocation14] sm:$0x1]
          %v3256 = vperm.slane %v3254, 0
          %v3322 = vunpack.c.l.b16 %v3190
          %v3323 = vunpack.c.l.b16 %v3191
          %v3324 = vunpack.c.l.b16 %v3192
          %v3325 = vunpack.c.l.b16 %v3193
          %v3326 = vunpack.c.l.b16 %v3194
          %v3327 = vunpack.c.l.b16 %v3195
          %v3328 = vunpack.c.l.b16 %v3196
          %v3329 = vunpack.c.l.b16 %v3197
          %v3330 = vunpack.c.l.b16 %v3198
          %v3331 = vunpack.c.l.b16 %v3199
          %v3332 = vunpack.c.l.b16 %v3200
          %v3333 = vunpack.c.l.b16 %v3201
          %v3334 = vunpack.c.l.b16 %v3202
          %v3335 = vunpack.c.l.b16 %v3203
          %v3336 = vunpack.c.l.b16 %v3204
          %v3337 = vunpack.c.l.b16 %v3205
          %v3338 = vunpack.c.l.b16 %v3206
          %v3339 = vunpack.c.l.b16 %v3207
          %v3340 = vunpack.c.l.b16 %v3208
          %v3341 = vunpack.c.l.b16 %v3209
          %v3342 = vunpack.c.l.b16 %v3210
          %v3343 = vunpack.c.l.b16 %v3211
          %v3344 = vunpack.c.l.b16 %v3212
          %v3345 = vunpack.c.l.b16 %v3213
          %v3346 = vunpack.c.l.b16 %v3214
          %v3347 = vunpack.c.l.b16 %v3215
          %v3348 = vunpack.c.l.b16 %v3216
          %v3349 = vunpack.c.l.b16 %v3217
          %v3350 = vunpack.c.l.b16 %v3218
          %v3351 = vunpack.c.l.b16 %v3219
          %v3352 = vunpack.c.l.b16 %v3220
          %v3353 = vunpack.c.l.b16 %v3221
          %v3354 = vunpack.c.l.b16 %v3222
          %v3355 = vunpack.c.l.b16 %v3223
          %v3356 = vunpack.c.l.b16 %v3224
          %v3357 = vunpack.c.l.b16 %v3225
          %v3358 = vunpack.c.l.b16 %v3226
          %v3359 = vunpack.c.l.b16 %v3227
          %v3360 = vunpack.c.l.b16 %v3228
          %v3361 = vunpack.c.l.b16 %v3229
          %v3362 = vunpack.c.l.b16 %v3230
          %v3363 = vunpack.c.l.b16 %v3231
          %v3364 = vunpack.c.l.b16 %v3232
          %v3365 = vunpack.c.l.b16 %v3233
          %v3366 = vunpack.c.l.b16 %v3234
          %v3367 = vunpack.c.l.b16 %v3235
          %v3368 = vunpack.c.l.b16 %v3236
          %v3369 = vunpack.c.l.b16 %v3237
          %v3370 = vunpack.c.l.b16 %v3238
          %v3371 = vunpack.c.l.b16 %v3239
          %v3372 = vunpack.c.l.b16 %v3240
          %v3373 = vunpack.c.l.b16 %v3241
          %v3374 = vunpack.c.l.b16 %v3242
          %v3375 = vunpack.c.l.b16 %v3243
          %v3376 = vunpack.c.l.b16 %v3244
          %v3377 = vunpack.c.l.b16 %v3245
          %v3378 = vunpack.c.l.b16 %v3246
          %v3379 = vunpack.c.l.b16 %v3247
          %v3380 = vunpack.c.l.b16 %v3248
          %v3381 = vunpack.c.l.b16 %v3249
          %v3382 = vunpack.c.l.b16 %v3250
          %v3383 = vunpack.c.l.b16 %v3251
          %v3384 = vunpack.c.l.b16 %v3252
          %v3385 = vunpack.c.l.b16 %v3253
          %v3386 = vpack.c.b16 %v3323, %v3322
          %v3387 = vpack.c.b16 %v3325, %v3324
          %v3388 = vpack.c.b16 %v3327, %v3326
          %v3389 = vpack.c.b16 %v3329, %v3328
          %v3390 = vpack.c.b16 %v3331, %v3330
          %v3391 = vpack.c.b16 %v3333, %v3332
          %v3392 = vpack.c.b16 %v3335, %v3334
          %v3393 = vpack.c.b16 %v3337, %v3336
          %v3394 = vpack.c.b16 %v3339, %v3338
          %v3395 = vpack.c.b16 %v3341, %v3340
          %v3396 = vpack.c.b16 %v3343, %v3342
          %v3397 = vpack.c.b16 %v3345, %v3344
          %v3398 = vpack.c.b16 %v3347, %v3346
          %v3399 = vpack.c.b16 %v3349, %v3348
          %v3400 = vpack.c.b16 %v3351, %v3350
          %v3401 = vpack.c.b16 %v3353, %v3352
          %v3402 = vpack.c.b16 %v3355, %v3354
          %v3403 = vpack.c.b16 %v3357, %v3356
          %v3404 = vpack.c.b16 %v3359, %v3358
          %v3405 = vpack.c.b16 %v3361, %v3360
          %v3406 = vpack.c.b16 %v3363, %v3362
          %v3407 = vpack.c.b16 %v3365, %v3364
          %v3408 = vpack.c.b16 %v3367, %v3366
          %v3409 = vpack.c.b16 %v3369, %v3368
          %v3410 = vpack.c.b16 %v3371, %v3370
          %v3411 = vpack.c.b16 %v3373, %v3372
          %v3412 = vpack.c.b16 %v3375, %v3374
          %v3413 = vpack.c.b16 %v3377, %v3376
          %v3414 = vpack.c.b16 %v3379, %v3378
          %v3415 = vpack.c.b16 %v3381, %v3380
          %v3416 = vpack.c.b16 %v3383, %v3382
          %v3417 = vpack.c.b16 %v3385, %v3384
          %3450 = vmatpush.bf16.msra.mxu0 %v3393
          %3451 = vmatpush.bf16.msra.mxu0 %v3392
          %3452 = vmatpush.bf16.msra.mxu0 %v3391
          %3453 = vmatpush.bf16.msra.mxu0 %v3390
          %3454 = vmatpush.bf16.msra.mxu0 %v3389
          %3455 = vmatpush.bf16.msra.mxu0 %v3388
          %3456 = vmatpush.bf16.msra.mxu0 %v3387
          %3457 = vmatpush.bf16.msra.mxu0 %v3386
          %3458 = vmatmul.bf16.gmra.mxu0 %v3186
          %v3459 = vpop.f32.mrf.mxu0
          %v3460 = vadd.f32 %v3256, %v3459
          %v3461 = vpop.f32.mrf.mxu0
          %3462 = vdwg.mxu0
          %3463 = vmatpush.bf16.msra.mxu0 %v3401
          %3464 = vmatpush.bf16.msra.mxu0 %v3400
          %3465 = vmatpush.bf16.msra.mxu0 %v3399
          %3466 = vmatpush.bf16.msra.mxu0 %v3398
          %3467 = vmatpush.bf16.msra.mxu0 %v3397
          %3468 = vmatpush.bf16.msra.mxu0 %v3396
          %3469 = vmatpush.bf16.msra.mxu0 %v3395
          %3470 = vmatpush.bf16.msra.mxu0 %v3394
          %3471 = vmatmul.bf16.gmra.mxu0 %v3187
          %v3472 = vpop.f32.mrf.mxu0
          %v3473 = vadd.f32 %v3460, %v3472
          %v3474 = vpop.f32.mrf.mxu0
          %3475 = vdwg.mxu0
          %3476 = vmatpush.bf16.msra.mxu0 %v3409
          %3477 = vmatpush.bf16.msra.mxu0 %v3408
          %3478 = vmatpush.bf16.msra.mxu0 %v3407
          %3479 = vmatpush.bf16.msra.mxu0 %v3406
          %3480 = vmatpush.bf16.msra.mxu0 %v3405
          %3481 = vmatpush.bf16.msra.mxu0 %v3404
          %3482 = vmatpush.bf16.msra.mxu0 %v3403
          %3483 = vmatpush.bf16.msra.mxu0 %v3402
          %3484 = vmatmul.bf16.gmra.mxu0 %v3188
          %v3485 = vpop.f32.mrf.mxu0
          %v3486 = vadd.f32 %v3473, %v3485
          %v3487 = vpop.f32.mrf.mxu0
          %3488 = vdwg.mxu0
          %3489 = vmatpush.bf16.msra.mxu0 %v3417
          %3490 = vmatpush.bf16.msra.mxu0 %v3416
          %3491 = vmatpush.bf16.msra.mxu0 %v3415
          %3492 = vmatpush.bf16.msra.mxu0 %v3414
          %3493 = vmatpush.bf16.msra.mxu0 %v3413
          %3494 = vmatpush.bf16.msra.mxu0 %v3412
          %3495 = vmatpush.bf16.msra.mxu0 %v3411
          %3496 = vmatpush.bf16.msra.mxu0 %v3410
          %3497 = vmatmul.bf16.gmra.mxu0 %v3189
          %v3498 = vpop.f32.mrf.mxu0
          %v3499 = vadd.f32 %v3486, %v3498
          %v3500 = vpop.f32.mrf.mxu0
          %3501 = vdwg.mxu0
          %v3502 = vmax.f32 %v3499, 0.0
          %3503 = vst [vmem:[#allocation16] sm:$0xff] %v3502
        $region84: #{tpu_custom_call.1} parent=47 // pred_fallthru
          _
        // Predicated region
        $region85: #{tpu_custom_call.1} parent=47 // pred_check
          %p3504 = pneg %p205
        $region86: #{tpu_custom_call.1} parent=47 // pred_check_branch
          %3506 = sbr.rel (%p3504) target = $region88
        $region87: #{tpu_custom_call.1} parent=47 // pred_region
          %3508 = vsyncadd [#allocation5], 0
          %s3510 = sshll.u32 [#allocation15], 4
          %s3511 = int_to_ptr.vmem [resolvable:$true] %s3510
          %s3512 = sshll.u32 %s7, 4
          %s3513 = int_to_ptr.hbm [resolvable:$true] %s3512
          %3515 = dma.vmem_to_hbm [thread:$0]  %s3511, 128, %s3513, [#allocation5]
        $region88: #{tpu_custom_call.1} parent=47 // pred_fallthru
          _
        // Predicated region
        $region89: #{tpu_custom_call.1} parent=47 // pred_check
          %p3516 = pneg %p226
        $region90: #{tpu_custom_call.1} parent=47 // pred_check_branch
          %3518 = sbr.rel (%p3516) target = $region92
        $region91: #{tpu_custom_call.1} parent=47 // pred_region
          %3520 = vsyncadd [#allocation17], 0
          %s3522 = sshll.u32 [#allocation16], 4
          %s3523 = int_to_ptr.vmem [resolvable:$true] %s3522
          %s3524 = sshll.u32 %s8, 4
          %s3525 = int_to_ptr.hbm [resolvable:$true] %s3524
          %3527 = dma.vmem_to_hbm [thread:$0]  %s3523, 128, %s3525, [#allocation17]
        $region92: #{tpu_custom_call.1} parent=47 // pred_fallthru
          _
        // Predicated region
        $region93: #{tpu_custom_call.1} parent=47 // pred_check
          %p3528 = pneg %p205
        $region94: #{tpu_custom_call.1} parent=47 // pred_check_branch
          %3530 = sbr.rel (%p3528) target = $region96
        $region95: #{tpu_custom_call.1} parent=47 // pred_region
          %3532 = dma.done [#allocation5], 128
        $region96: #{tpu_custom_call.1} parent=47 // pred_fallthru
          _
        // Predicated region
        $region97: #{tpu_custom_call.1} parent=47 // pred_check
          %p3533 = pneg %p226
        $region98: #{tpu_custom_call.1} parent=47 // pred_check_branch
          %3535 = sbr.rel (%p3533) target = $region100
        $region99: #{tpu_custom_call.1} parent=47 // pred_region
          %3537 = dma.done [#allocation17], 128
        $region100: #{tpu_custom_call.1} parent=47 // pred_fallthru
          _
      $region48: #{tpu_custom_call.1} parent=5 // pred_fallthru
        _
      %p3538 = scmp.le.s32.totalorder 2, %s25
      // Predicated region
      $region101: #{tpu_custom_call.1} parent=5 // pred_check
        %p3539 = pneg %p3538
      $region102: #{tpu_custom_call.1} parent=5 // pred_check_branch
        %3541 = sbr.rel (%p3539) target = $region104
      $region103: #{tpu_custom_call.1} parent=5 // pred_region
        %s3542 = ssub.s32 %s25, 2
      $region104: #{tpu_custom_call.1} parent=5 // pred_fallthru
        _
    $region6: #{tpu_custom_call.1} parent=1 // loop_footer
      %s29 = sadd.s32 1, %s25
    $region7: #{tpu_custom_call.1} parent=1 // loop_footer_branch
      %24 = sbr.rel target = $region3
    $region8: #{tpu_custom_call.1} parent=1 // loop_exit
      _
    %3543 = vsyncpa [#allocation4], 1
    %s3544 = scalar_lea.sflag [#allocation4], 1
    %3545 = vsyncpa %s3544, 1
    %3546 = vsyncpa [#allocation7], 1
    %s3547 = scalar_lea.sflag [#allocation7], 1
    %3548 = vsyncpa %s3547, 1
    %3549 = vsyncpa [#allocation10], 1
    %s3550 = scalar_lea.sflag [#allocation10], 1
    %3551 = vsyncpa %s3550, 1
    %3552 = vsyncpa [#allocation13], 1
    %3553 = vsyncpa [#allocation5], 1
    %s3554 = scalar_lea.sflag [#allocation5], 1
    %3555 = vsyncpa %s3554, 1
    %3556 = vsyncpa [#allocation17], 1

</llo_original>
